<compile_context>
chip_gen: v7x
topology: tpu7x:2x2x1
jax: 0.10.0
libtpu: 0.0.40
codegen_flags: <defaults>
</compile_context>

<pallas_src>
import string
from functools import partial

import numpy as np
import jax
import jax.numpy as jnp
from jax.experimental import pallas as pl
from jax.experimental.pallas import tpu as pltpu


def _round_up(n: int, m: int) -> int:
    return ((n + m - 1) // m) * m


# ------------------- init-time kernel: MLP over the whole table --------------
def _table_mlp_kernel(table_ref, w1_ref, b1_ref, w2_ref, b2_ref, o_ref):
    # Sigmoid(L2(SiLU(L1(SiLU(table))))) applied to every table row, once.
    e = table_ref[...]
    h = e * jax.nn.sigmoid(e)                                           # SiLU
    h = jnp.dot(h, w1_ref[...],
                precision=jax.lax.Precision.HIGHEST,
                preferred_element_type=jnp.float32) + b1_ref[...]
    h = h * jax.nn.sigmoid(h)                                           # SiLU
    h = jnp.dot(h, w2_ref[...],
                precision=jax.lax.Precision.HIGHEST,
                preferred_element_type=jnp.float32) + b2_ref[...]
    o_ref[...] = jax.nn.sigmoid(h)                                      # Sigmoid


def precompute_out_table(table_p, w1, b1, w2, b2):
    V_pad, D = table_p.shape
    vmem = pl.BlockSpec(memory_space=pltpu.MemorySpace.VMEM)
    return pl.pallas_call(
        _table_mlp_kernel,
        out_shape=jax.ShapeDtypeStruct((V_pad, D), jnp.float32),
        in_specs=[vmem] * 5,
        out_specs=vmem,
    )(table_p, w1, b1, w2, b2)


# ------------- forward kernel: single-block, lane-dense one-hot gather -------
def _gather_kernel(idx_ref, tableT_ref, o_ref):
    # idx_ref   : (1, BS)      int32   (lane-major index row)
    # tableT_ref: (D, V_pad)   f32     (precomputed MLP(table), transposed)
    # o_ref     : (D, BS)      f32     (BS on lanes -> unmasked stores)
    v_pad = tableT_ref.shape[1]
    bs = idx_ref.shape[1]
    ids = idx_ref[...]                                             # (1, BS)
    rows = jax.lax.broadcasted_iota(jnp.int32, (v_pad, bs), 0)     # vocab on sublanes
    onehot = (rows == ids).astype(jnp.float32)                     # (V_pad, BS)
    # Exact row selection as a single full-f32 MXU pass.
    o_ref[...] = jnp.dot(tableT_ref[...], onehot,
                         precision=jax.lax.Precision.HIGHEST,
                         preferred_element_type=jnp.float32)


def gather_rows_pallas(ids_row, table_T):
    D, V_pad = table_T.shape
    BS = ids_row.shape[1]
    vmem = pl.BlockSpec(memory_space=pltpu.MemorySpace.VMEM)
    return pl.pallas_call(
        _gather_kernel,
        out_shape=jax.ShapeDtypeStruct((D, BS), jnp.float32),
        in_specs=[vmem, vmem],           # fully resident: no grid, no per-step DMA
        out_specs=vmem,
    )(ids_row, table_T)


@partial(jax.jit, static_argnames=("b", "s_pad"))
def _forward_padded(ids_row, table_T, *, b, s_pad):
    """One jitted call: pallas gather (lane-dense) + tiny XLA transpose/reshape."""
    out_t = gather_rows_pallas(ids_row, table_T)         # (D, BS_pad)
    D = table_T.shape[0]
    return out_t.T[: b * s_pad].reshape(b, s_pad, D)     # (B, s_pad, D)


# --------------------------- Module (glue in JAX) ----------------------------
class SentenceGraphEmbeddingJAX:
    # Deterministic, in-script parameter init (synthetic weights, no checkpoint).
    def __init__(self, chars: str, embedding_dim: int = 32,
                 window_size: int = 4, stride: int = 3, seed: int = 0):
        self.chars = chars
        self.chars_size = len(chars) + 1          # +1 pad token
        self.window_size = window_size
        self.stride = stride
        self.dim = embedding_dim

        key = jax.random.PRNGKey(seed)
        k_emb, k_w1, k_b1, k_w2, k_b2 = jax.random.split(key, 5)
        D, V = embedding_dim, self.chars_size
        # nn.Embedding(V, D)
        self.table = jax.random.normal(k_emb, (V, D), jnp.float32)
        # nn.Linear(D, D) x2 — stored pre-transposed so kernels do x @ W
        bound = 1.0 / (D ** 0.5)
        self.w1 = jax.random.uniform(k_w1, (D, D), jnp.float32, -bound, bound)
        self.b1 = jax.random.uniform(k_b1, (1, D), jnp.float32, -bound, bound)
        self.w2 = jax.random.uniform(k_w2, (D, D), jnp.float32, -bound, bound)
        self.b2 = jax.random.uniform(k_b2, (1, D), jnp.float32, -bound, bound)

        # Fold the ENTIRE position-wise MLP into a per-character output table
        # at init (one Pallas kernel invocation).  V is padded to 128 so the
        # transposed table's lane dim is dense for the forward gather.
        self.v_pad = _round_up(V, 128)
        table_p = jnp.zeros((self.v_pad, D), jnp.float32).at[:V].set(self.table)
        out_tab = precompute_out_table(table_p, self.w1, self.b1, self.w2, self.b2)
        # Zero padded rows: MLP(0) is NOT zero; never let it be gatherable.
        row_valid = (jnp.arange(self.v_pad) < V)[:, None]
        out_tab = jnp.where(row_valid, out_tab, 0.0)
        # Transposed layout (D, V_pad): BS becomes the lane dim in forward.
        self.out_table_T = jax.block_until_ready(out_tab.T)

    def _char_indexes(self, x: str):
        idx = [self.chars.index(c) for c in x]
        need = self.window_size * 2
        if len(idx) < need:                       # pad with pad-token id = len(chars)
            idx = idx + [len(self.chars)] * (need - len(idx))
        return idx

    def embed_batch_padded(self, sentences):
        """One jitted pallas_call over a batch; returns padded (B, s_pad, D) + lens."""
        idx_lists = [self._char_indexes(s) for s in sentences]
        lens = [len(i) for i in idx_lists]
        B = len(sentences)
        s_pad = _round_up(max(lens), 8)
        pad_id = len(self.chars)

        # Vectorized numpy index packing; one H2D copy of a lane-major row.
        idx_mat = np.full((B, s_pad), pad_id, dtype=np.int32)
        for i, ids in enumerate(idx_lists):
            idx_mat[i, : len(ids)] = np.asarray(ids, dtype=np.int32)
        bs = B * s_pad
        bs_pad = _round_up(max(bs, 128), 128)                 # lane-dense output
        ids_row = np.full((1, bs_pad), pad_id, dtype=np.int32)
        ids_row[0, :bs] = idx_mat.reshape(-1)

        out = _forward_padded(jnp.asarray(ids_row), self.out_table_T,
                              b=B, s_pad=s_pad)               # (B, s_pad, D)
        return out, lens

    def embed_batch(self, sentences):
        out, lens = self.embed_batch_padded(sentences)
        return [out[i, : lens[i]] for i in range(len(sentences))]

    def __call__(self, x: str):
        # TODO(synk): to_graph() builds a python-set edge list that forward()
        # discards; it has no tensor semantics and is intentionally omitted.
        return self.embed_batch([x])[0]


# --------------------------------- main --------------------------------------
if __name__ == "__main__":
    CHARS = string.ascii_lowercase + string.digits + " .,'"
    model = SentenceGraphEmbeddingJAX(chars=CHARS, embedding_dim=32,
                                      window_size=4, stride=3, seed=0)

    words = [
        'closeup of bins of food that include broccoli and bread.',
        'a meal is presented in brightly colored plastic trays.',
    ]

    # One batched kernel launch (single resident block, no grid) for both sentences.
    padded, lens = model.embed_batch_padded(words)
    padded = jax.block_until_ready(padded)
    embs = [padded[i, : lens[i]] for i in range(len(words))]

    # Pure-JAX reference (HIGHEST precision matmuls) for correctness.
    def ref_forward(word):
        ids = jnp.asarray(model._char_indexes(word), dtype=jnp.int32)
        e = model.table[ids]
        h = e * jax.nn.sigmoid(e)
        h = jnp.dot(h, model.w1, precision=jax.lax.Precision.HIGHEST) + model.b1
        h = h * jax.nn.sigmoid(h)
        h = jnp.dot(h, model.w2, precision=jax.lax.Precision.HIGHEST) + model.b2
        return jax.nn.sigmoid(h)

    for w, emb in zip(words, embs):
        assert emb.shape == (len(w), 32)
        assert emb.dtype == jnp.float32
        assert bool(jnp.all(jnp.isfinite(emb)))
        assert bool(jnp.all((emb >= 0.0) & (emb <= 1.0)))          # Sigmoid range
        assert bool(jnp.allclose(emb, ref_forward(w), atol=1e-4, rtol=1e-4))

    # Single-sentence path (B=1) agrees with the batched path.
    emb0 = jax.block_until_ready(model(words[0]))
    assert bool(jnp.allclose(emb0, embs[0], atol=1e-6, rtol=1e-6))

    print("KERNEL_OK")
</pallas_src>

<mosaic_0001>
module attributes {stable_mosaic.version = 11 : i64} {
  func.func @_table_mlp_kernel(%arg0: memref<128x32xf32, #tpu.memory_space<vmem>>, %arg1: memref<32x32xf32, #tpu.memory_space<vmem>>, %arg2: memref<1x32xf32, #tpu.memory_space<vmem>>, %arg3: memref<32x32xf32, #tpu.memory_space<vmem>>, %arg4: memref<1x32xf32, #tpu.memory_space<vmem>>, %arg5: memref<128x32xf32, #tpu.memory_space<vmem>>) attributes {dimension_semantics = [], scalar_prefetch = 0 : i64, scratch_operands = 0 : i64, tpu.core_type = #tpu.core_type<tc>} {
    %c0 = arith.constant 0 : index
    %c0_0 = arith.constant 0 : index
    %0 = vector.load %arg0[%c0, %c0_0] : memref<128x32xf32, #tpu.memory_space<vmem>>, vector<128x32xf32>
    %1 = arith.negf %0 : vector<128x32xf32>
    %2 = math.exp %1 : vector<128x32xf32>
    %cst = arith.constant 1.000000e+00 : f32
    %3 = vector.broadcast %cst : f32 to vector<128x32xf32>
    %4 = arith.addf %3, %2 : vector<128x32xf32>
    %5 = arith.divf %3, %4 : vector<128x32xf32>
    %6 = arith.mulf %0, %5 : vector<128x32xf32>
    %c0_1 = arith.constant 0 : index
    %c0_2 = arith.constant 0 : index
    %7 = vector.load %arg1[%c0_1, %c0_2] : memref<32x32xf32, #tpu.memory_space<vmem>>, vector<32x32xf32>
    %cst_3 = arith.constant dense<0.000000e+00> : vector<128x32xf32>
    %8 = tpu.matmul %6, %7, %cst_3 {dimension_numbers = #tpu.dot_dimension_numbers<[1], [0], [0], [1], [0, 0, 1, 1], [], []>, precision = #tpu.contract_precision<fp32>} : vector<128x32xf32>, vector<32x32xf32>, vector<128x32xf32> -> vector<128x32xf32>
    %c0_4 = arith.constant 0 : index
    %c0_5 = arith.constant 0 : index
    %9 = vector.load %arg2[%c0_4, %c0_5] : memref<1x32xf32, #tpu.memory_space<vmem>>, vector<1x32xf32>
    %10 = vector.broadcast %9 : vector<1x32xf32> to vector<128x32xf32>
    %11 = arith.addf %8, %10 : vector<128x32xf32>
    %12 = arith.negf %11 : vector<128x32xf32>
    %13 = math.exp %12 : vector<128x32xf32>
    %cst_6 = arith.constant 1.000000e+00 : f32
    %14 = vector.broadcast %cst_6 : f32 to vector<128x32xf32>
    %15 = arith.addf %14, %13 : vector<128x32xf32>
    %16 = arith.divf %14, %15 : vector<128x32xf32>
    %17 = arith.mulf %11, %16 : vector<128x32xf32>
    %c0_7 = arith.constant 0 : index
    %c0_8 = arith.constant 0 : index
    %18 = vector.load %arg3[%c0_7, %c0_8] : memref<32x32xf32, #tpu.memory_space<vmem>>, vector<32x32xf32>
    %cst_9 = arith.constant dense<0.000000e+00> : vector<128x32xf32>
    %19 = tpu.matmul %17, %18, %cst_9 {dimension_numbers = #tpu.dot_dimension_numbers<[1], [0], [0], [1], [0, 0, 1, 1], [], []>, precision = #tpu.contract_precision<fp32>} : vector<128x32xf32>, vector<32x32xf32>, vector<128x32xf32> -> vector<128x32xf32>
    %c0_10 = arith.constant 0 : index
    %c0_11 = arith.constant 0 : index
    %20 = vector.load %arg4[%c0_10, %c0_11] : memref<1x32xf32, #tpu.memory_space<vmem>>, vector<1x32xf32>
    %21 = vector.broadcast %20 : vector<1x32xf32> to vector<128x32xf32>
    %22 = arith.addf %19, %21 : vector<128x32xf32>
    %23 = arith.negf %22 : vector<128x32xf32>
    %24 = math.exp %23 : vector<128x32xf32>
    %cst_12 = arith.constant 1.000000e+00 : f32
    %25 = vector.broadcast %cst_12 : f32 to vector<128x32xf32>
    %26 = arith.addf %25, %24 : vector<128x32xf32>
    %27 = arith.divf %25, %26 : vector<128x32xf32>
    %c0_13 = arith.constant 0 : index
    %c0_14 = arith.constant 0 : index
    %28 = vector.load %arg5[%c0_13, %c0_14] : memref<128x32xf32, #tpu.memory_space<vmem>>, vector<128x32xf32>
    tpu.vector_store %arg5[%c0_13, %c0_14], %27 {strides = array<i32>} : memref<128x32xf32, #tpu.memory_space<vmem>>, vector<128x32xf32>,
    return
  }
}

</mosaic_0001>

<llo_original>
// kernel: tpu_custom_call.1
$region0: #{tpu_custom_call.1}
  #allocation0 [shape = 'u32[]', space=smem, size = 0x4, offset = 0x4, fixed_abs, tag = 'smem constant byte address 0x4 - core index']
  #allocation1 [shape = 'u32[144,128]{1,0:T(1,128)}', space=vmem, size = 0x12000, scoped, tag = 'internal scratch']
  %s0 = inlined_call_operand.vmem [shape: f32[128,32], index: 0, kind: input, shape index: {}]
  %s1 = inlined_call_operand.vmem [shape: f32[32,32], index: 1, kind: input, shape index: {}]
  %s2 = inlined_call_operand.vmem [shape: f32[1,32], index: 2, kind: input, shape index: {}]
  %s3 = inlined_call_operand.vmem [shape: f32[32,32], index: 3, kind: input, shape index: {}]
  %s4 = inlined_call_operand.vmem [shape: f32[1,32], index: 4, kind: input, shape index: {}]
  %s5 = inlined_call_operand.vmem [shape: f32[128,32], index: 5, kind: output, shape index: {}]
  %s6 = sld [smem:[#allocation0]]
  $region30: #{tpu_custom_call.1} parent=0
    _
  %s8 = ssub.s32 1, %s6
  %s9 = scalar_select 0, %s8, %s6
  // Predicated region
  $region2: #{tpu_custom_call.1} parent=0 // pred_check
    _
  $region3: #{tpu_custom_call.1} parent=0 // pred_check_branch
    %11 = sbr.rel (0) target = $region5
  $region4: #{tpu_custom_call.1} parent=0 // pred_region
    _
  $region5: #{tpu_custom_call.1} parent=0 // pred_fallthru
    _
  // Predicated region
  $region6: #{tpu_custom_call.1} parent=0 // pred_check
    _
  $region7: #{tpu_custom_call.1} parent=0 // pred_check_branch
    %13 = sbr.rel (0) target = $region9
  $region8: #{tpu_custom_call.1} parent=0 // pred_region
    _
  $region9: #{tpu_custom_call.1} parent=0 // pred_fallthru
    _
  // Predicated region
  $region10: #{tpu_custom_call.1} parent=0 // pred_check
    _
  $region11: #{tpu_custom_call.1} parent=0 // pred_check_branch
    %15 = sbr.rel (0) target = $region13
  $region12: #{tpu_custom_call.1} parent=0 // pred_region
    _
  $region13: #{tpu_custom_call.1} parent=0 // pred_fallthru
    _
  // Predicated region
  $region14: #{tpu_custom_call.1} parent=0 // pred_check
    _
  $region15: #{tpu_custom_call.1} parent=0 // pred_check_branch
    %17 = sbr.rel (0) target = $region17
  $region16: #{tpu_custom_call.1} parent=0 // pred_region
    _
  $region17: #{tpu_custom_call.1} parent=0 // pred_fallthru
    _
  // Predicated region
  $region18: #{tpu_custom_call.1} parent=0 // pred_check
    _
  $region19: #{tpu_custom_call.1} parent=0 // pred_check_branch
    %19 = sbr.rel (0) target = $region21
  $region20: #{tpu_custom_call.1} parent=0 // pred_region
    _
  $region21: #{tpu_custom_call.1} parent=0 // pred_fallthru
    _
  %v20 = vld [vmem:[%s0] sm:$0xff]
  %v21 = vld [vmem:[%s0 + $0x8] sm:$0xff]
  %v22 = vld [vmem:[%s0 + $0x10] sm:$0xff]
  %v23 = vld [vmem:[%s0 + $0x18] sm:$0xff]
  %v24 = vld [vmem:[%s0 + $0x20] sm:$0xff]
  %v25 = vld [vmem:[%s0 + $0x28] sm:$0xff]
  %v26 = vld [vmem:[%s0 + $0x30] sm:$0xff]
  %v27 = vld [vmem:[%s0 + $0x38] sm:$0xff]
  %v28 = vld [vmem:[%s0 + $0x40] sm:$0xff]
  %v29 = vld [vmem:[%s0 + $0x48] sm:$0xff]
  %v30 = vld [vmem:[%s0 + $0x50] sm:$0xff]
  %v31 = vld [vmem:[%s0 + $0x58] sm:$0xff]
  %v32 = vld [vmem:[%s0 + $0x60] sm:$0xff]
  %v33 = vld [vmem:[%s0 + $0x68] sm:$0xff]
  %v34 = vld [vmem:[%s0 + $0x70] sm:$0xff]
  %v35 = vld [vmem:[%s0 + $0x78] sm:$0xff]
  %v36 = vxor.u32 %v20, 2147483648
  %v37 = vxor.u32 %v21, 2147483648
  %v38 = vxor.u32 %v22, 2147483648
  %v39 = vxor.u32 %v23, 2147483648
  %v40 = vxor.u32 %v24, 2147483648
  %v41 = vxor.u32 %v25, 2147483648
  %v42 = vxor.u32 %v26, 2147483648
  %v43 = vxor.u32 %v27, 2147483648
  %v44 = vxor.u32 %v28, 2147483648
  %v45 = vxor.u32 %v29, 2147483648
  %v46 = vxor.u32 %v30, 2147483648
  %v47 = vxor.u32 %v31, 2147483648
  %v48 = vxor.u32 %v32, 2147483648
  %v49 = vxor.u32 %v33, 2147483648
  %v50 = vxor.u32 %v34, 2147483648
  %v51 = vxor.u32 %v35, 2147483648
  %v52 = vmul.f32 %v36, 1.442695
  %v53 = vpow.pop %v52
  %v54 = vmul.f32 %v37, 1.442695
  %v55 = vpow.pop %v54
  %v56 = vmul.f32 %v38, 1.442695
  %v57 = vpow.pop %v56
  %v58 = vmul.f32 %v39, 1.442695
  %v59 = vpow.pop %v58
  %v60 = vmul.f32 %v40, 1.442695
  %v61 = vpow.pop %v60
  %v62 = vmul.f32 %v41, 1.442695
  %v63 = vpow.pop %v62
  %v64 = vmul.f32 %v42, 1.442695
  %v65 = vpow.pop %v64
  %v66 = vmul.f32 %v43, 1.442695
  %v67 = vpow.pop %v66
  %v68 = vmul.f32 %v44, 1.442695
  %v69 = vpow.pop %v68
  %v70 = vmul.f32 %v45, 1.442695
  %v71 = vpow.pop %v70
  %v72 = vmul.f32 %v46, 1.442695
  %v73 = vpow.pop %v72
  %v74 = vmul.f32 %v47, 1.442695
  %v75 = vpow.pop %v74
  %v76 = vmul.f32 %v48, 1.442695
  %v77 = vpow.pop %v76
  %v78 = vmul.f32 %v49, 1.442695
  %v79 = vpow.pop %v78
  %v80 = vmul.f32 %v50, 1.442695
  %v81 = vpow.pop %v80
  %v82 = vmul.f32 %v51, 1.442695
  %v83 = vpow.pop %v82
  %v84 = vadd.f32 %v53, 1.0
  %v85 = vadd.f32 %v55, 1.0
  %v86 = vadd.f32 %v57, 1.0
  %v87 = vadd.f32 %v59, 1.0
  %v88 = vadd.f32 %v61, 1.0
  %v89 = vadd.f32 %v63, 1.0
  %v90 = vadd.f32 %v65, 1.0
  %v91 = vadd.f32 %v67, 1.0
  %v92 = vadd.f32 %v69, 1.0
  %v93 = vadd.f32 %v71, 1.0
  %v94 = vadd.f32 %v73, 1.0
  %v95 = vadd.f32 %v75, 1.0
  %v96 = vadd.f32 %v77, 1.0
  %v97 = vadd.f32 %v79, 1.0
  %v98 = vadd.f32 %v81, 1.0
  %v99 = vadd.f32 %v83, 1.0
  %v100 = vrcp.pop %v84
  %v101 = vmul.f32 1.0, %v100
  %v102 = vrcp.pop %v85
  %v103 = vmul.f32 1.0, %v102
  %v104 = vrcp.pop %v86
  %v105 = vmul.f32 1.0, %v104
  %v106 = vrcp.pop %v87
  %v107 = vmul.f32 1.0, %v106
  %v108 = vrcp.pop %v88
  %v109 = vmul.f32 1.0, %v108
  %v110 = vrcp.pop %v89
  %v111 = vmul.f32 1.0, %v110
  %v112 = vrcp.pop %v90
  %v113 = vmul.f32 1.0, %v112
  %v114 = vrcp.pop %v91
  %v115 = vmul.f32 1.0, %v114
  %v116 = vrcp.pop %v92
  %v117 = vmul.f32 1.0, %v116
  %v118 = vrcp.pop %v93
  %v119 = vmul.f32 1.0, %v118
  %v120 = vrcp.pop %v94
  %v121 = vmul.f32 1.0, %v120
  %v122 = vrcp.pop %v95
  %v123 = vmul.f32 1.0, %v122
  %v124 = vrcp.pop %v96
  %v125 = vmul.f32 1.0, %v124
  %v126 = vrcp.pop %v97
  %v127 = vmul.f32 1.0, %v126
  %v128 = vrcp.pop %v98
  %v129 = vmul.f32 1.0, %v128
  %v130 = vrcp.pop %v99
  %v131 = vmul.f32 1.0, %v130
  %v132 = vmul.f32 %v20, %v101
  %v133 = vmul.f32 %v21, %v103
  %v134 = vmul.f32 %v22, %v105
  %v135 = vmul.f32 %v23, %v107
  %v136 = vmul.f32 %v24, %v109
  %v137 = vmul.f32 %v25, %v111
  %v138 = vmul.f32 %v26, %v113
  %v139 = vmul.f32 %v27, %v115
  %v140 = vmul.f32 %v28, %v117
  %v141 = vmul.f32 %v29, %v119
  %v142 = vmul.f32 %v30, %v121
  %v143 = vmul.f32 %v31, %v123
  %v144 = vmul.f32 %v32, %v125
  %v145 = vmul.f32 %v33, %v127
  %v146 = vmul.f32 %v34, %v129
  %v147 = vmul.f32 %v35, %v131
  %v148 = vld [vmem:[%s1] sm:$0xff]
  %v149 = vld [vmem:[%s1 + $0x8] sm:$0xff]
  %v150 = vld [vmem:[%s1 + $0x10] sm:$0xff]
  %v151 = vld [vmem:[%s1 + $0x18] sm:$0xff]
  %v152 = vld [vmem:[%s2] sm:$0x1]
  %v154 = vlaneseq
  %v155 = vshrl.u32 %v154, 7
  %v156 = vsub.s32 0, %v155
  %v157 = vrot.slane %v152, %v156
  %vm159 = vcmask 261120
  %v161 = vsel %vm159, %v132, 0
  %v164 = vsel %vm159, %v133, 0
  %v167 = vsel %vm159, %v134, 0
  %v170 = vsel %vm159, %v135, 0
  %v173 = vsel %vm159, %v136, 0
  %v176 = vsel %vm159, %v137, 0
  %v179 = vsel %vm159, %v138, 0
  %v182 = vsel %vm159, %v139, 0
  %v185 = vsel %vm159, %v140, 0
  %v188 = vsel %vm159, %v141, 0
  %v191 = vsel %vm159, %v142, 0
  %v194 = vsel %vm159, %v143, 0
  %v197 = vsel %vm159, %v144, 0
  %v200 = vsel %vm159, %v145, 0
  %v203 = vsel %vm159, %v146, 0
  %v206 = vsel %vm159, %v147, 0
  %208 = vmatprep.subr.mxu0 0.0
  %v209 = vand.u32 %v148, 4294901760
  %210 = vmatpush1.msra.mxu0 %v209
  %211 = vmatprep.subr.mxu0 0.0
  %v212 = vand.u32 %v149, 4294901760
  %213 = vmatpush1.msra.mxu0 %v212
  %214 = vmatprep.subr.mxu0 0.0
  %v215 = vand.u32 %v150, 4294901760
  %216 = vmatpush1.msra.mxu0 %v215
  %217 = vmatprep.subr.mxu0 0.0
  %v218 = vand.u32 %v151, 4294901760
  %219 = vmatpush1.msra.mxu0 %v218
  %220 = vmatprep.subr.mxu0 0.0
  %221 = vmatpush1.msra.mxu0 0.0
  %222 = vmatprep.subr.mxu0 0.0
  %223 = vmatpush1.msra.mxu0 0.0
  %224 = vmatprep.subr.mxu0 0.0
  %225 = vmatpush1.msra.mxu0 0.0
  %226 = vmatprep.subr.mxu0 0.0
  %227 = vmatpush1.msra.mxu0 0.0
  %228 = vmatprep.subr.mxu0 0.0
  %229 = vmatpush1.msra.mxu0 0.0
  %230 = vmatprep.subr.mxu0 0.0
  %231 = vmatpush1.msra.mxu0 0.0
  %232 = vmatprep.subr.mxu0 0.0
  %233 = vmatpush1.msra.mxu0 0.0
  %234 = vmatprep.subr.mxu0 0.0
  %235 = vmatpush1.msra.mxu0 0.0
  %236 = vmatprep.subr.mxu0 0.0
  %237 = vmatpush1.msra.mxu0 0.0
  %238 = vmatprep.subr.mxu0 0.0
  %239 = vmatpush1.msra.mxu0 0.0
  %240 = vmatprep.subr.mxu0 0.0
  %241 = vmatpush1.msra.mxu0 0.0
  %242 = vmatprep.subr.mxu0 0.0
  %243 = vmatpush1.msra.mxu0 0.0
  %244 = vmatprep.subr.mxu0 0.0
  %245 = vmatpush1.msra.mxu0 0.0
  %246 = vmatprep.subr.mxu0 0.0
  %247 = vmatpush1.msra.mxu0 0.0
  %248 = vmatprep.subr.mxu0 0.0
  %249 = vmatpush1.msra.mxu0 0.0
  %250 = vmatprep.subr.mxu0 0.0
  %251 = vmatpush1.msra.mxu0 0.0
  %252 = vmatprep.subr.mxu0 0.0
  %253 = vmatpush1.msra.mxu0 0.0
  %254 = vmatprep.subr.mxu0 0.0
  %255 = vmatpush1.msra.mxu0 0.0
  %256 = vmatprep.subr.mxu0 0.0
  %257 = vmatpush1.msra.mxu0 0.0
  %258 = vmatprep.subr.mxu0 0.0
  %259 = vmatpush1.msra.mxu0 0.0
  %260 = vmatprep.subr.mxu0 0.0
  %261 = vmatpush1.msra.mxu0 0.0
  %262 = vmatprep.subr.mxu0 0.0
  %263 = vmatpush1.msra.mxu0 0.0
  %264 = vmatprep.subr.mxu0 0.0
  %265 = vmatpush1.msra.mxu0 0.0
  %266 = vmatprep.subr.mxu0 0.0
  %267 = vmatpush1.msra.mxu0 0.0
  %268 = vmatprep.subr.mxu0 0.0
  %269 = vmatpush1.msra.mxu0 0.0
  %270 = vmatprep.subr.mxu0 0.0
  %271 = vmatpush1.msra.mxu0 0.0
  %272 = vmatprep.subr.mxu0 0.0
  %273 = vmatpush1.msra.mxu0 0.0
  %274 = vmatprep.subr.mxu0 0.0
  %275 = vmatpush1.msra.mxu0 0.0
  %276 = vmatprep.mubr.f32.mxu0 0.0
  %v277 = vand.u32 %v161, 4294901760
  %v278 = vsub.f32 %v161, %v277
  %v279 = vand.u32 %v278, 4294901760
  %v280 = vsub.f32 %v278, %v279
  %v281 = vand.u32 %v280, 4294901760
  %282 = vmatmul.mubr.f32.gmra.mrb[0].mxu0 %v281
  %v283 = vpop.f32.mrb[0].mxu0
  %v284 = vadd.f32 %v157, %v283
  %v285 = vpop.f32.mrb[0].mxu0
  %286 = vmatprep.mubr.f32.mxu0 0.0
  %v287 = vand.u32 %v164, 4294901760
  %v288 = vsub.f32 %v164, %v287
  %v289 = vand.u32 %v288, 4294901760
  %v290 = vsub.f32 %v288, %v289
  %v291 = vand.u32 %v290, 4294901760
  %292 = vmatmul.mubr.f32.gmra.mrb[0].mxu0 %v291
  %v293 = vpop.f32.mrb[0].mxu0
  %v294 = vadd.f32 %v157, %v293
  %v295 = vpop.f32.mrb[0].mxu0
  %296 = vmatprep.mubr.f32.mxu0 0.0
  %v297 = vand.u32 %v167, 4294901760
  %v298 = vsub.f32 %v167, %v297
  %v299 = vand.u32 %v298, 4294901760
  %v300 = vsub.f32 %v298, %v299
  %v301 = vand.u32 %v300, 4294901760
  %302 = vmatmul.mubr.f32.gmra.mrb[0].mxu0 %v301
  %v303 = vpop.f32.mrb[0].mxu0
  %v304 = vadd.f32 %v157, %v303
  %v305 = vpop.f32.mrb[0].mxu0
  %306 = vmatprep.mubr.f32.mxu0 0.0
  %v307 = vand.u32 %v170, 4294901760
  %v308 = vsub.f32 %v170, %v307
  %v309 = vand.u32 %v308, 4294901760
  %v310 = vsub.f32 %v308, %v309
  %v311 = vand.u32 %v310, 4294901760
  %312 = vmatmul.mubr.f32.gmra.mrb[0].mxu0 %v311
  %v313 = vpop.f32.mrb[0].mxu0
  %v314 = vadd.f32 %v157, %v313
  %v315 = vpop.f32.mrb[0].mxu0
  %316 = vmatprep.mubr.f32.mxu0 0.0
  %v317 = vand.u32 %v173, 4294901760
  %v318 = vsub.f32 %v173, %v317
  %v319 = vand.u32 %v318, 4294901760
  %v320 = vsub.f32 %v318, %v319
  %v321 = vand.u32 %v320, 4294901760
  %322 = vmatmul.mubr.f32.gmra.mrb[0].mxu0 %v321
  %v323 = vpop.f32.mrb[0].mxu0
  %v324 = vadd.f32 %v157, %v323
  %v325 = vpop.f32.mrb[0].mxu0
  %326 = vmatprep.mubr.f32.mxu0 0.0
  %v327 = vand.u32 %v176, 4294901760
  %v328 = vsub.f32 %v176, %v327
  %v329 = vand.u32 %v328, 4294901760
  %v330 = vsub.f32 %v328, %v329
  %v331 = vand.u32 %v330, 4294901760
  %332 = vmatmul.mubr.f32.gmra.mrb[0].mxu0 %v331
  %v333 = vpop.f32.mrb[0].mxu0
  %v334 = vadd.f32 %v157, %v333
  %v335 = vpop.f32.mrb[0].mxu0
  %336 = vmatprep.mubr.f32.mxu0 0.0
  %v337 = vand.u32 %v179, 4294901760
  %v338 = vsub.f32 %v179, %v337
  %v339 = vand.u32 %v338, 4294901760
  %v340 = vsub.f32 %v338, %v339
  %v341 = vand.u32 %v340, 4294901760
  %342 = vmatmul.mubr.f32.gmra.mrb[0].mxu0 %v341
  %v343 = vpop.f32.mrb[0].mxu0
  %v344 = vadd.f32 %v157, %v343
  %v345 = vpop.f32.mrb[0].mxu0
  %346 = vmatprep.mubr.f32.mxu0 0.0
  %v347 = vand.u32 %v182, 4294901760
  %v348 = vsub.f32 %v182, %v347
  %v349 = vand.u32 %v348, 4294901760
  %v350 = vsub.f32 %v348, %v349
  %v351 = vand.u32 %v350, 4294901760
  %352 = vmatmul.mubr.f32.gmra.mrb[0].mxu0 %v351
  %v353 = vpop.f32.mrb[0].mxu0
  %v354 = vadd.f32 %v157, %v353
  %v355 = vpop.f32.mrb[0].mxu0
  %356 = vmatprep.mubr.f32.mxu0 0.0
  %v357 = vand.u32 %v185, 4294901760
  %v358 = vsub.f32 %v185, %v357
  %v359 = vand.u32 %v358, 4294901760
  %v360 = vsub.f32 %v358, %v359
  %v361 = vand.u32 %v360, 4294901760
  %362 = vmatmul.mubr.f32.gmra.mrb[0].mxu0 %v361
  %v363 = vpop.f32.mrb[0].mxu0
  %v364 = vadd.f32 %v157, %v363
  %v365 = vpop.f32.mrb[0].mxu0
  %366 = vmatprep.mubr.f32.mxu0 0.0
  %v367 = vand.u32 %v188, 4294901760
  %v368 = vsub.f32 %v188, %v367
  %v369 = vand.u32 %v368, 4294901760
  %v370 = vsub.f32 %v368, %v369
  %v371 = vand.u32 %v370, 4294901760
  %372 = vmatmul.mubr.f32.gmra.mrb[0].mxu0 %v371
  %v373 = vpop.f32.mrb[0].mxu0
  %v374 = vadd.f32 %v157, %v373
  %v375 = vpop.f32.mrb[0].mxu0
  %376 = vmatprep.mubr.f32.mxu0 0.0
  %v377 = vand.u32 %v191, 4294901760
  %v378 = vsub.f32 %v191, %v377
  %v379 = vand.u32 %v378, 4294901760
  %v380 = vsub.f32 %v378, %v379
  %v381 = vand.u32 %v380, 4294901760
  %382 = vmatmul.mubr.f32.gmra.mrb[0].mxu0 %v381
  %v383 = vpop.f32.mrb[0].mxu0
  %v384 = vadd.f32 %v157, %v383
  %v385 = vpop.f32.mrb[0].mxu0
  %386 = vmatprep.mubr.f32.mxu0 0.0
  %v387 = vand.u32 %v194, 4294901760
  %v388 = vsub.f32 %v194, %v387
  %v389 = vand.u32 %v388, 4294901760
  %v390 = vsub.f32 %v388, %v389
  %v391 = vand.u32 %v390, 4294901760
  %392 = vmatmul.mubr.f32.gmra.mrb[0].mxu0 %v391
  %v393 = vpop.f32.mrb[0].mxu0
  %v394 = vadd.f32 %v157, %v393
  %v395 = vpop.f32.mrb[0].mxu0
  %396 = vmatprep.mubr.f32.mxu0 0.0
  %v397 = vand.u32 %v197, 4294901760
  %v398 = vsub.f32 %v197, %v397
  %v399 = vand.u32 %v398, 4294901760
  %v400 = vsub.f32 %v398, %v399
  %v401 = vand.u32 %v400, 4294901760
  %402 = vmatmul.mubr.f32.gmra.mrb[0].mxu0 %v401
  %v403 = vpop.f32.mrb[0].mxu0
  %v404 = vadd.f32 %v157, %v403
  %v405 = vpop.f32.mrb[0].mxu0
  %406 = vmatprep.mubr.f32.mxu0 0.0
  %v407 = vand.u32 %v200, 4294901760
  %v408 = vsub.f32 %v200, %v407
  %v409 = vand.u32 %v408, 4294901760
  %v410 = vsub.f32 %v408, %v409
  %v411 = vand.u32 %v410, 4294901760
  %412 = vmatmul.mubr.f32.gmra.mrb[0].mxu0 %v411
  %v413 = vpop.f32.mrb[0].mxu0
  %v414 = vadd.f32 %v157, %v413
  %v415 = vpop.f32.mrb[0].mxu0
  %416 = vmatprep.mubr.f32.mxu0 0.0
  %v417 = vand.u32 %v203, 4294901760
  %v418 = vsub.f32 %v203, %v417
  %v419 = vand.u32 %v418, 4294901760
  %v420 = vsub.f32 %v418, %v419
  %v421 = vand.u32 %v420, 4294901760
  %422 = vmatmul.mubr.f32.gmra.mrb[0].mxu0 %v421
  %v423 = vpop.f32.mrb[0].mxu0
  %v424 = vadd.f32 %v157, %v423
  %v425 = vpop.f32.mrb[0].mxu0
  %426 = vmatprep.mubr.f32.mxu0 0.0
  %v427 = vand.u32 %v206, 4294901760
  %v428 = vsub.f32 %v206, %v427
  %v429 = vand.u32 %v428, 4294901760
  %v430 = vsub.f32 %v428, %v429
  %v431 = vand.u32 %v430, 4294901760
  %432 = vmatmul.mubr.f32.gmra.mrb[0].mxu0 %v431
  %v433 = vpop.f32.mrb[0].mxu0
  %v434 = vadd.f32 %v157, %v433
  %v435 = vpop.f32.mrb[0].mxu0
  %436 = vdwg.mxu0
  %437 = vmatprep.subr.mxu0 0.0
  %v438 = vand.u32 %v148, 4294901760
  %v439 = vsub.f32 %v148, %v438
  %v440 = vand.u32 %v439, 4294901760
  %v441 = vsub.f32 %v439, %v440
  %v442 = vand.u32 %v441, 4294901760
  %443 = vmatpush1.msra.mxu0 %v442
  %444 = vmatprep.subr.mxu0 0.0
  %v445 = vand.u32 %v149, 4294901760
  %v446 = vsub.f32 %v149, %v445
  %v447 = vand.u32 %v446, 4294901760
  %v448 = vsub.f32 %v446, %v447
  %v449 = vand.u32 %v448, 4294901760
  %450 = vmatpush1.msra.mxu0 %v449
  %451 = vmatprep.subr.mxu0 0.0
  %v452 = vand.u32 %v150, 4294901760
  %v453 = vsub.f32 %v150, %v452
  %v454 = vand.u32 %v453, 4294901760
  %v455 = vsub.f32 %v453, %v454
  %v456 = vand.u32 %v455, 4294901760
  %457 = vmatpush1.msra.mxu0 %v456
  %458 = vmatprep.subr.mxu0 0.0
  %v459 = vand.u32 %v151, 4294901760
  %v460 = vsub.f32 %v151, %v459
  %v461 = vand.u32 %v460, 4294901760
  %v462 = vsub.f32 %v460, %v461
  %v463 = vand.u32 %v462, 4294901760
  %464 = vmatpush1.msra.mxu0 %v463
  %465 = vmatprep.subr.mxu0 0.0
  %466 = vmatpush1.msra.mxu0 0.0
  %467 = vmatprep.subr.mxu0 0.0
  %468 = vmatpush1.msra.mxu0 0.0
  %469 = vmatprep.subr.mxu0 0.0
  %470 = vmatpush1.msra.mxu0 0.0
  %471 = vmatprep.subr.mxu0 0.0
  %472 = vmatpush1.msra.mxu0 0.0
  %473 = vmatprep.subr.mxu0 0.0
  %474 = vmatpush1.msra.mxu0 0.0
  %475 = vmatprep.subr.mxu0 0.0
  %476 = vmatpush1.msra.mxu0 0.0
  %477 = vmatprep.subr.mxu0 0.0
  %478 = vmatpush1.msra.mxu0 0.0
  %479 = vmatprep.subr.mxu0 0.0
  %480 = vmatpush1.msra.mxu0 0.0
  %481 = vmatprep.subr.mxu0 0.0
  %482 = vmatpush1.msra.mxu0 0.0
  %483 = vmatprep.subr.mxu0 0.0
  %484 = vmatpush1.msra.mxu0 0.0
  %485 = vmatprep.subr.mxu0 0.0
  %486 = vmatpush1.msra.mxu0 0.0
  %487 = vmatprep.subr.mxu0 0.0
  %488 = vmatpush1.msra.mxu0 0.0
  %489 = vmatprep.subr.mxu0 0.0
  %490 = vmatpush1.msra.mxu0 0.0
  %491 = vmatprep.subr.mxu0 0.0
  %492 = vmatpush1.msra.mxu0 0.0
  %493 = vmatprep.subr.mxu0 0.0
  %494 = vmatpush1.msra.mxu0 0.0
  %495 = vmatprep.subr.mxu0 0.0
  %496 = vmatpush1.msra.mxu0 0.0
  %497 = vmatprep.subr.mxu0 0.0
  %498 = vmatpush1.msra.mxu0 0.0
  %499 = vmatprep.subr.mxu0 0.0
  %500 = vmatpush1.msra.mxu0 0.0
  %501 = vmatprep.subr.mxu0 0.0
  %502 = vmatpush1.msra.mxu0 0.0
  %503 = vmatprep.subr.mxu0 0.0
  %504 = vmatpush1.msra.mxu0 0.0
  %505 = vmatprep.subr.mxu0 0.0
  %506 = vmatpush1.msra.mxu0 0.0
  %507 = vmatprep.subr.mxu0 0.0
  %508 = vmatpush1.msra.mxu0 0.0
  %509 = vmatprep.subr.mxu0 0.0
  %510 = vmatpush1.msra.mxu0 0.0
  %511 = vmatprep.subr.mxu0 0.0
  %512 = vmatpush1.msra.mxu0 0.0
  %513 = vmatprep.subr.mxu0 0.0
  %514 = vmatpush1.msra.mxu0 0.0
  %515 = vmatprep.subr.mxu0 0.0
  %516 = vmatpush1.msra.mxu0 0.0
  %517 = vmatprep.subr.mxu0 0.0
  %518 = vmatpush1.msra.mxu0 0.0
  %519 = vmatprep.subr.mxu0 0.0
  %520 = vmatpush1.msra.mxu0 0.0
  %521 = vmatprep.mubr.f32.mxu0 0.0
  %v522 = vand.u32 %v161, 4294901760
  %523 = vmatmul.mubr.f32.gmra.mrb[0].mxu0 %v522
  %v524 = vpop.f32.mrb[0].mxu0
  %v525 = vadd.f32 %v284, %v524
  %v526 = vpop.f32.mrb[0].mxu0
  %527 = vmatprep.mubr.f32.mxu0 0.0
  %v528 = vand.u32 %v164, 4294901760
  %529 = vmatmul.mubr.f32.gmra.mrb[0].mxu0 %v528
  %v530 = vpop.f32.mrb[0].mxu0
  %v531 = vadd.f32 %v294, %v530
  %v532 = vpop.f32.mrb[0].mxu0
  %533 = vmatprep.mubr.f32.mxu0 0.0
  %v534 = vand.u32 %v167, 4294901760
  %535 = vmatmul.mubr.f32.gmra.mrb[0].mxu0 %v534
  %v536 = vpop.f32.mrb[0].mxu0
  %v537 = vadd.f32 %v304, %v536
  %v538 = vpop.f32.mrb[0].mxu0
  %539 = vmatprep.mubr.f32.mxu0 0.0
  %v540 = vand.u32 %v170, 4294901760
  %541 = vmatmul.mubr.f32.gmra.mrb[0].mxu0 %v540
  %v542 = vpop.f32.mrb[0].mxu0
  %v543 = vadd.f32 %v314, %v542
  %v544 = vpop.f32.mrb[0].mxu0
  %545 = vmatprep.mubr.f32.mxu0 0.0
  %v546 = vand.u32 %v173, 4294901760
  %547 = vmatmul.mubr.f32.gmra.mrb[0].mxu0 %v546
  %v548 = vpop.f32.mrb[0].mxu0
  %v549 = vadd.f32 %v324, %v548
  %v550 = vpop.f32.mrb[0].mxu0
  %551 = vmatprep.mubr.f32.mxu0 0.0
  %v552 = vand.u32 %v176, 4294901760
  %553 = vmatmul.mubr.f32.gmra.mrb[0].mxu0 %v552
  %v554 = vpop.f32.mrb[0].mxu0
  %v555 = vadd.f32 %v334, %v554
  %v556 = vpop.f32.mrb[0].mxu0
  %557 = vmatprep.mubr.f32.mxu0 0.0
  %v558 = vand.u32 %v179, 4294901760
  %559 = vmatmul.mubr.f32.gmra.mrb[0].mxu0 %v558
  %v560 = vpop.f32.mrb[0].mxu0
  %v561 = vadd.f32 %v344, %v560
  %v562 = vpop.f32.mrb[0].mxu0
  %563 = vmatprep.mubr.f32.mxu0 0.0
  %v564 = vand.u32 %v182, 4294901760
  %565 = vmatmul.mubr.f32.gmra.mrb[0].mxu0 %v564
  %v566 = vpop.f32.mrb[0].mxu0
  %v567 = vadd.f32 %v354, %v566
  %v568 = vpop.f32.mrb[0].mxu0
  %569 = vmatprep.mubr.f32.mxu0 0.0
  %v570 = vand.u32 %v185, 4294901760
  %571 = vmatmul.mubr.f32.gmra.mrb[0].mxu0 %v570
  %v572 = vpop.f32.mrb[0].mxu0
  %v573 = vadd.f32 %v364, %v572
  %v574 = vpop.f32.mrb[0].mxu0
  %575 = vmatprep.mubr.f32.mxu0 0.0
  %v576 = vand.u32 %v188, 4294901760
  %577 = vmatmul.mubr.f32.gmra.mrb[0].mxu0 %v576
  %v578 = vpop.f32.mrb[0].mxu0
  %v579 = vadd.f32 %v374, %v578
  %v580 = vpop.f32.mrb[0].mxu0
  %581 = vmatprep.mubr.f32.mxu0 0.0
  %v582 = vand.u32 %v191, 4294901760
  %583 = vmatmul.mubr.f32.gmra.mrb[0].mxu0 %v582
  %v584 = vpop.f32.mrb[0].mxu0
  %v585 = vadd.f32 %v384, %v584
  %v586 = vpop.f32.mrb[0].mxu0
  %587 = vmatprep.mubr.f32.mxu0 0.0
  %v588 = vand.u32 %v194, 4294901760
  %589 = vmatmul.mubr.f32.gmra.mrb[0].mxu0 %v588
  %v590 = vpop.f32.mrb[0].mxu0
  %v591 = vadd.f32 %v394, %v590
  %v592 = vpop.f32.mrb[0].mxu0
  %593 = vmatprep.mubr.f32.mxu0 0.0
  %v594 = vand.u32 %v197, 4294901760
  %595 = vmatmul.mubr.f32.gmra.mrb[0].mxu0 %v594
  %v596 = vpop.f32.mrb[0].mxu0
  %v597 = vadd.f32 %v404, %v596
  %v598 = vpop.f32.mrb[0].mxu0
  %599 = vmatprep.mubr.f32.mxu0 0.0
  %v600 = vand.u32 %v200, 4294901760
  %601 = vmatmul.mubr.f32.gmra.mrb[0].mxu0 %v600
  %v602 = vpop.f32.mrb[0].mxu0
  %v603 = vadd.f32 %v414, %v602
  %v604 = vpop.f32.mrb[0].mxu0
  %605 = vmatprep.mubr.f32.mxu0 0.0
  %v606 = vand.u32 %v203, 4294901760
  %607 = vmatmul.mubr.f32.gmra.mrb[0].mxu0 %v606
  %v608 = vpop.f32.mrb[0].mxu0
  %v609 = vadd.f32 %v424, %v608
  %v610 = vpop.f32.mrb[0].mxu0
  %611 = vmatprep.mubr.f32.mxu0 0.0
  %v612 = vand.u32 %v206, 4294901760
  %613 = vmatmul.mubr.f32.gmra.mrb[0].mxu0 %v612
  %v614 = vpop.f32.mrb[0].mxu0
  %v615 = vadd.f32 %v434, %v614
  %v616 = vpop.f32.mrb[0].mxu0
  %617 = vdwg.mxu0
  %618 = vmatprep.subr.mxu0 0.0
  %v619 = vand.u32 %v148, 4294901760
  %v620 = vsub.f32 %v148, %v619
  %621 = vmatpush1.msra.mxu0 %v620
  %622 = vmatprep.subr.mxu0 0.0
  %v623 = vand.u32 %v149, 4294901760
  %v624 = vsub.f32 %v149, %v623
  %625 = vmatpush1.msra.mxu0 %v624
  %626 = vmatprep.subr.mxu0 0.0
  %v627 = vand.u32 %v150, 4294901760
  %v628 = vsub.f32 %v150, %v627
  %629 = vmatpush1.msra.mxu0 %v628
  %630 = vmatprep.subr.mxu0 0.0
  %v631 = vand.u32 %v151, 4294901760
  %v632 = vsub.f32 %v151, %v631
  %633 = vmatpush1.msra.mxu0 %v632
  %634 = vmatprep.subr.mxu0 0.0
  %635 = vmatpush1.msra.mxu0 0.0
  %636 = vmatprep.subr.mxu0 0.0
  %637 = vmatpush1.msra.mxu0 0.0
  %638 = vmatprep.subr.mxu0 0.0
  %639 = vmatpush1.msra.mxu0 0.0
  %640 = vmatprep.subr.mxu0 0.0
  %641 = vmatpush1.msra.mxu0 0.0
  %642 = vmatprep.subr.mxu0 0.0
  %643 = vmatpush1.msra.mxu0 0.0
  %644 = vmatprep.subr.mxu0 0.0
  %645 = vmatpush1.msra.mxu0 0.0
  %646 = vmatprep.subr.mxu0 0.0
  %647 = vmatpush1.msra.mxu0 0.0
  %648 = vmatprep.subr.mxu0 0.0
  %649 = vmatpush1.msra.mxu0 0.0
  %650 = vmatprep.subr.mxu0 0.0
  %651 = vmatpush1.msra.mxu0 0.0
  %652 = vmatprep.subr.mxu0 0.0
  %653 = vmatpush1.msra.mxu0 0.0
  %654 = vmatprep.subr.mxu0 0.0
  %655 = vmatpush1.msra.mxu0 0.0
  %656 = vmatprep.subr.mxu0 0.0
  %657 = vmatpush1.msra.mxu0 0.0
  %658 = vmatprep.subr.mxu0 0.0
  %659 = vmatpush1.msra.mxu0 0.0
  %660 = vmatprep.subr.mxu0 0.0
  %661 = vmatpush1.msra.mxu0 0.0
  %662 = vmatprep.subr.mxu0 0.0
  %663 = vmatpush1.msra.mxu0 0.0
  %664 = vmatprep.subr.mxu0 0.0
  %665 = vmatpush1.msra.mxu0 0.0
  %666 = vmatprep.subr.mxu0 0.0
  %667 = vmatpush1.msra.mxu0 0.0
  %668 = vmatprep.subr.mxu0 0.0
  %669 = vmatpush1.msra.mxu0 0.0
  %670 = vmatprep.subr.mxu0 0.0
  %671 = vmatpush1.msra.mxu0 0.0
  %672 = vmatprep.subr.mxu0 0.0
  %673 = vmatpush1.msra.mxu0 0.0
  %674 = vmatprep.subr.mxu0 0.0
  %675 = vmatpush1.msra.mxu0 0.0
  %676 = vmatprep.subr.mxu0 0.0
  %677 = vmatpush1.msra.mxu0 0.0
  %678 = vmatprep.subr.mxu0 0.0
  %679 = vmatpush1.msra.mxu0 0.0
  %680 = vmatprep.subr.mxu0 0.0
  %681 = vmatpush1.msra.mxu0 0.0
  %682 = vmatprep.subr.mxu0 0.0
  %683 = vmatpush1.msra.mxu0 0.0
  %684 = vmatprep.subr.mxu0 0.0
  %685 = vmatpush1.msra.mxu0 0.0
  %686 = vmatprep.subr.mxu0 0.0
  %687 = vmatpush1.msra.mxu0 0.0
  %688 = vmatprep.subr.mxu0 0.0
  %689 = vmatpush1.msra.mxu0 0.0
  %690 = vmatprep.mubr.f32.mxu0 0.0
  %v691 = vand.u32 %v161, 4294901760
  %v692 = vsub.f32 %v161, %v691
  %693 = vmatmul.mubr.f32.gmra.mrb[0].mxu0 %v692
  %v694 = vpop.f32.mrb[0].mxu0
  %v695 = vadd.f32 %v525, %v694
  %v696 = vpop.f32.mrb[0].mxu0
  %697 = vmatprep.mubr.f32.mxu0 0.0
  %v698 = vand.u32 %v164, 4294901760
  %v699 = vsub.f32 %v164, %v698
  %700 = vmatmul.mubr.f32.gmra.mrb[0].mxu0 %v699
  %v701 = vpop.f32.mrb[0].mxu0
  %v702 = vadd.f32 %v531, %v701
  %v703 = vpop.f32.mrb[0].mxu0
  %704 = vmatprep.mubr.f32.mxu0 0.0
  %v705 = vand.u32 %v167, 4294901760
  %v706 = vsub.f32 %v167, %v705
  %707 = vmatmul.mubr.f32.gmra.mrb[0].mxu0 %v706
  %v708 = vpop.f32.mrb[0].mxu0
  %v709 = vadd.f32 %v537, %v708
  %v710 = vpop.f32.mrb[0].mxu0
  %711 = vmatprep.mubr.f32.mxu0 0.0
  %v712 = vand.u32 %v170, 4294901760
  %v713 = vsub.f32 %v170, %v712
  %714 = vmatmul.mubr.f32.gmra.mrb[0].mxu0 %v713
  %v715 = vpop.f32.mrb[0].mxu0
  %v716 = vadd.f32 %v543, %v715
  %v717 = vpop.f32.mrb[0].mxu0
  %718 = vmatprep.mubr.f32.mxu0 0.0
  %v719 = vand.u32 %v173, 4294901760
  %v720 = vsub.f32 %v173, %v719
  %721 = vmatmul.mubr.f32.gmra.mrb[0].mxu0 %v720
  %v722 = vpop.f32.mrb[0].mxu0
  %v723 = vadd.f32 %v549, %v722
  %v724 = vpop.f32.mrb[0].mxu0
  %725 = vmatprep.mubr.f32.mxu0 0.0
  %v726 = vand.u32 %v176, 4294901760
  %v727 = vsub.f32 %v176, %v726
  %728 = vmatmul.mubr.f32.gmra.mrb[0].mxu0 %v727
  %v729 = vpop.f32.mrb[0].mxu0
  %v730 = vadd.f32 %v555, %v729
  %v731 = vpop.f32.mrb[0].mxu0
  %732 = vmatprep.mubr.f32.mxu0 0.0
  %v733 = vand.u32 %v179, 4294901760
  %v734 = vsub.f32 %v179, %v733
  %735 = vmatmul.mubr.f32.gmra.mrb[0].mxu0 %v734
  %v736 = vpop.f32.mrb[0].mxu0
  %v737 = vadd.f32 %v561, %v736
  %v738 = vpop.f32.mrb[0].mxu0
  %739 = vmatprep.mubr.f32.mxu0 0.0
  %v740 = vand.u32 %v182, 4294901760
  %v741 = vsub.f32 %v182, %v740
  %742 = vmatmul.mubr.f32.gmra.mrb[0].mxu0 %v741
  %v743 = vpop.f32.mrb[0].mxu0
  %v744 = vadd.f32 %v567, %v743
  %v745 = vpop.f32.mrb[0].mxu0
  %746 = vmatprep.mubr.f32.mxu0 0.0
  %v747 = vand.u32 %v185, 4294901760
  %v748 = vsub.f32 %v185, %v747
  %749 = vmatmul.mubr.f32.gmra.mrb[0].mxu0 %v748
  %v750 = vpop.f32.mrb[0].mxu0
  %v751 = vadd.f32 %v573, %v750
  %v752 = vpop.f32.mrb[0].mxu0
  %753 = vmatprep.mubr.f32.mxu0 0.0
  %v754 = vand.u32 %v188, 4294901760
  %v755 = vsub.f32 %v188, %v754
  %756 = vmatmul.mubr.f32.gmra.mrb[0].mxu0 %v755
  %v757 = vpop.f32.mrb[0].mxu0
  %v758 = vadd.f32 %v579, %v757
  %v759 = vpop.f32.mrb[0].mxu0
  %760 = vmatprep.mubr.f32.mxu0 0.0
  %v761 = vand.u32 %v191, 4294901760
  %v762 = vsub.f32 %v191, %v761
  %763 = vmatmul.mubr.f32.gmra.mrb[0].mxu0 %v762
  %v764 = vpop.f32.mrb[0].mxu0
  %v765 = vadd.f32 %v585, %v764
  %v766 = vpop.f32.mrb[0].mxu0
  %767 = vmatprep.mubr.f32.mxu0 0.0
  %v768 = vand.u32 %v194, 4294901760
  %v769 = vsub.f32 %v194, %v768
  %770 = vmatmul.mubr.f32.gmra.mrb[0].mxu0 %v769
  %v771 = vpop.f32.mrb[0].mxu0
  %v772 = vadd.f32 %v591, %v771
  %v773 = vpop.f32.mrb[0].mxu0
  %774 = vmatprep.mubr.f32.mxu0 0.0
  %v775 = vand.u32 %v197, 4294901760
  %v776 = vsub.f32 %v197, %v775
  %777 = vmatmul.mubr.f32.gmra.mrb[0].mxu0 %v776
  %v778 = vpop.f32.mrb[0].mxu0
  %v779 = vadd.f32 %v597, %v778
  %v780 = vpop.f32.mrb[0].mxu0
  %781 = vmatprep.mubr.f32.mxu0 0.0
  %v782 = vand.u32 %v200, 4294901760
  %v783 = vsub.f32 %v200, %v782
  %784 = vmatmul.mubr.f32.gmra.mrb[0].mxu0 %v783
  %v785 = vpop.f32.mrb[0].mxu0
  %v786 = vadd.f32 %v603, %v785
  %v787 = vpop.f32.mrb[0].mxu0
  %788 = vmatprep.mubr.f32.mxu0 0.0
  %v789 = vand.u32 %v203, 4294901760
  %v790 = vsub.f32 %v203, %v789
  %791 = vmatmul.mubr.f32.gmra.mrb[0].mxu0 %v790
  %v792 = vpop.f32.mrb[0].mxu0
  %v793 = vadd.f32 %v609, %v792
  %v794 = vpop.f32.mrb[0].mxu0
  %795 = vmatprep.mubr.f32.mxu0 0.0
  %v796 = vand.u32 %v206, 4294901760
  %v797 = vsub.f32 %v206, %v796
  %798 = vmatmul.mubr.f32.gmra.mrb[0].mxu0 %v797
  %v799 = vpop.f32.mrb[0].mxu0
  %v800 = vadd.f32 %v615, %v799
  %v801 = vpop.f32.mrb[0].mxu0
  %802 = vdwg.mxu0
  %803 = vmatprep.subr.mxu0 0.0
  %v804 = vand.u32 %v148, 4294901760
  %805 = vmatpush1.msra.mxu0 %v804
  %806 = vmatprep.subr.mxu0 0.0
  %v807 = vand.u32 %v149, 4294901760
  %808 = vmatpush1.msra.mxu0 %v807
  %809 = vmatprep.subr.mxu0 0.0
  %v810 = vand.u32 %v150, 4294901760
  %811 = vmatpush1.msra.mxu0 %v810
  %812 = vmatprep.subr.mxu0 0.0
  %v813 = vand.u32 %v151, 4294901760
  %814 = vmatpush1.msra.mxu0 %v813
  %815 = vmatprep.subr.mxu0 0.0
  %816 = vmatpush1.msra.mxu0 0.0
  %817 = vmatprep.subr.mxu0 0.0
  %818 = vmatpush1.msra.mxu0 0.0
  %819 = vmatprep.subr.mxu0 0.0
  %820 = vmatpush1.msra.mxu0 0.0
  %821 = vmatprep.subr.mxu0 0.0
  %822 = vmatpush1.msra.mxu0 0.0
  %823 = vmatprep.subr.mxu0 0.0
  %824 = vmatpush1.msra.mxu0 0.0
  %825 = vmatprep.subr.mxu0 0.0
  %826 = vmatpush1.msra.mxu0 0.0
  %827 = vmatprep.subr.mxu0 0.0
  %828 = vmatpush1.msra.mxu0 0.0
  %829 = vmatprep.subr.mxu0 0.0
  %830 = vmatpush1.msra.mxu0 0.0
  %831 = vmatprep.subr.mxu0 0.0
  %832 = vmatpush1.msra.mxu0 0.0
  %833 = vmatprep.subr.mxu0 0.0
  %834 = vmatpush1.msra.mxu0 0.0
  %835 = vmatprep.subr.mxu0 0.0
  %836 = vmatpush1.msra.mxu0 0.0
  %837 = vmatprep.subr.mxu0 0.0
  %838 = vmatpush1.msra.mxu0 0.0
  %839 = vmatprep.subr.mxu0 0.0
  %840 = vmatpush1.msra.mxu0 0.0
  %841 = vmatprep.subr.mxu0 0.0
  %842 = vmatpush1.msra.mxu0 0.0
  %843 = vmatprep.subr.mxu0 0.0
  %844 = vmatpush1.msra.mxu0 0.0
  %845 = vmatprep.subr.mxu0 0.0
  %846 = vmatpush1.msra.mxu0 0.0
  %847 = vmatprep.subr.mxu0 0.0
  %848 = vmatpush1.msra.mxu0 0.0
  %849 = vmatprep.subr.mxu0 0.0
  %850 = vmatpush1.msra.mxu0 0.0
  %851 = vmatprep.subr.mxu0 0.0
  %852 = vmatpush1.msra.mxu0 0.0
  %853 = vmatprep.subr.mxu0 0.0
  %854 = vmatpush1.msra.mxu0 0.0
  %855 = vmatprep.subr.mxu0 0.0
  %856 = vmatpush1.msra.mxu0 0.0
  %857 = vmatprep.subr.mxu0 0.0
  %858 = vmatpush1.msra.mxu0 0.0
  %859 = vmatprep.subr.mxu0 0.0
  %860 = vmatpush1.msra.mxu0 0.0
  %861 = vmatprep.subr.mxu0 0.0
  %862 = vmatpush1.msra.mxu0 0.0
  %863 = vmatprep.subr.mxu0 0.0
  %864 = vmatpush1.msra.mxu0 0.0
  %865 = vmatprep.subr.mxu0 0.0
  %866 = vmatpush1.msra.mxu0 0.0
  %867 = vmatprep.subr.mxu0 0.0
  %868 = vmatpush1.msra.mxu0 0.0
  %869 = vmatprep.subr.mxu0 0.0
  %870 = vmatpush1.msra.mxu0 0.0
  %871 = vmatprep.mubr.f32.mxu0 0.0
  %v872 = vand.u32 %v161, 4294901760
  %v873 = vsub.f32 %v161, %v872
  %v874 = vand.u32 %v873, 4294901760
  %875 = vmatmul.mubr.f32.gmra.mrb[0].mxu0 %v874
  %v876 = vpop.f32.mrb[0].mxu0
  %v877 = vadd.f32 %v695, %v876
  %v878 = vpop.f32.mrb[0].mxu0
  %879 = vmatprep.mubr.f32.mxu0 0.0
  %v880 = vand.u32 %v164, 4294901760
  %v881 = vsub.f32 %v164, %v880
  %v882 = vand.u32 %v881, 4294901760
  %883 = vmatmul.mubr.f32.gmra.mrb[0].mxu0 %v882
  %v884 = vpop.f32.mrb[0].mxu0
  %v885 = vadd.f32 %v702, %v884
  %v886 = vpop.f32.mrb[0].mxu0
  %887 = vmatprep.mubr.f32.mxu0 0.0
  %v888 = vand.u32 %v167, 4294901760
  %v889 = vsub.f32 %v167, %v888
  %v890 = vand.u32 %v889, 4294901760
  %891 = vmatmul.mubr.f32.gmra.mrb[0].mxu0 %v890
  %v892 = vpop.f32.mrb[0].mxu0
  %v893 = vadd.f32 %v709, %v892
  %v894 = vpop.f32.mrb[0].mxu0
  %895 = vmatprep.mubr.f32.mxu0 0.0
  %v896 = vand.u32 %v170, 4294901760
  %v897 = vsub.f32 %v170, %v896
  %v898 = vand.u32 %v897, 4294901760
  %899 = vmatmul.mubr.f32.gmra.mrb[0].mxu0 %v898
  %v900 = vpop.f32.mrb[0].mxu0
  %v901 = vadd.f32 %v716, %v900
  %v902 = vpop.f32.mrb[0].mxu0
  %903 = vmatprep.mubr.f32.mxu0 0.0
  %v904 = vand.u32 %v173, 4294901760
  %v905 = vsub.f32 %v173, %v904
  %v906 = vand.u32 %v905, 4294901760
  %907 = vmatmul.mubr.f32.gmra.mrb[0].mxu0 %v906
  %v908 = vpop.f32.mrb[0].mxu0
  %v909 = vadd.f32 %v723, %v908
  %v910 = vpop.f32.mrb[0].mxu0
  %911 = vmatprep.mubr.f32.mxu0 0.0
  %v912 = vand.u32 %v176, 4294901760
  %v913 = vsub.f32 %v176, %v912
  %v914 = vand.u32 %v913, 4294901760
  %915 = vmatmul.mubr.f32.gmra.mrb[0].mxu0 %v914
  %v916 = vpop.f32.mrb[0].mxu0
  %v917 = vadd.f32 %v730, %v916
  %v918 = vpop.f32.mrb[0].mxu0
  %919 = vmatprep.mubr.f32.mxu0 0.0
  %v920 = vand.u32 %v179, 4294901760
  %v921 = vsub.f32 %v179, %v920
  %v922 = vand.u32 %v921, 4294901760
  %923 = vmatmul.mubr.f32.gmra.mrb[0].mxu0 %v922
  %v924 = vpop.f32.mrb[0].mxu0
  %v925 = vadd.f32 %v737, %v924
  %v926 = vpop.f32.mrb[0].mxu0
  %927 = vmatprep.mubr.f32.mxu0 0.0
  %v928 = vand.u32 %v182, 4294901760
  %v929 = vsub.f32 %v182, %v928
  %v930 = vand.u32 %v929, 4294901760
  %931 = vmatmul.mubr.f32.gmra.mrb[0].mxu0 %v930
  %v932 = vpop.f32.mrb[0].mxu0
  %v933 = vadd.f32 %v744, %v932
  %v934 = vpop.f32.mrb[0].mxu0
  %935 = vmatprep.mubr.f32.mxu0 0.0
  %v936 = vand.u32 %v185, 4294901760
  %v937 = vsub.f32 %v185, %v936
  %v938 = vand.u32 %v937, 4294901760
  %939 = vmatmul.mubr.f32.gmra.mrb[0].mxu0 %v938
  %v940 = vpop.f32.mrb[0].mxu0
  %v941 = vadd.f32 %v751, %v940
  %v942 = vpop.f32.mrb[0].mxu0
  %943 = vmatprep.mubr.f32.mxu0 0.0
  %v944 = vand.u32 %v188, 4294901760
  %v945 = vsub.f32 %v188, %v944
  %v946 = vand.u32 %v945, 4294901760
  %947 = vmatmul.mubr.f32.gmra.mrb[0].mxu0 %v946
  %v948 = vpop.f32.mrb[0].mxu0
  %v949 = vadd.f32 %v758, %v948
  %v950 = vpop.f32.mrb[0].mxu0
  %951 = vmatprep.mubr.f32.mxu0 0.0
  %v952 = vand.u32 %v191, 4294901760
  %v953 = vsub.f32 %v191, %v952
  %v954 = vand.u32 %v953, 4294901760
  %955 = vmatmul.mubr.f32.gmra.mrb[0].mxu0 %v954
  %v956 = vpop.f32.mrb[0].mxu0
  %v957 = vadd.f32 %v765, %v956
  %v958 = vpop.f32.mrb[0].mxu0
  %959 = vmatprep.mubr.f32.mxu0 0.0
  %v960 = vand.u32 %v194, 4294901760
  %v961 = vsub.f32 %v194, %v960
  %v962 = vand.u32 %v961, 4294901760
  %963 = vmatmul.mubr.f32.gmra.mrb[0].mxu0 %v962
  %v964 = vpop.f32.mrb[0].mxu0
  %v965 = vadd.f32 %v772, %v964
  %v966 = vpop.f32.mrb[0].mxu0
  %967 = vmatprep.mubr.f32.mxu0 0.0
  %v968 = vand.u32 %v197, 4294901760
  %v969 = vsub.f32 %v197, %v968
  %v970 = vand.u32 %v969, 4294901760
  %971 = vmatmul.mubr.f32.gmra.mrb[0].mxu0 %v970
  %v972 = vpop.f32.mrb[0].mxu0
  %v973 = vadd.f32 %v779, %v972
  %v974 = vpop.f32.mrb[0].mxu0
  %975 = vmatprep.mubr.f32.mxu0 0.0
  %v976 = vand.u32 %v200, 4294901760
  %v977 = vsub.f32 %v200, %v976
  %v978 = vand.u32 %v977, 4294901760
  %979 = vmatmul.mubr.f32.gmra.mrb[0].mxu0 %v978
  %v980 = vpop.f32.mrb[0].mxu0
  %v981 = vadd.f32 %v786, %v980
  %v982 = vpop.f32.mrb[0].mxu0
  %983 = vmatprep.mubr.f32.mxu0 0.0
  %v984 = vand.u32 %v203, 4294901760
  %v985 = vsub.f32 %v203, %v984
  %v986 = vand.u32 %v985, 4294901760
  %987 = vmatmul.mubr.f32.gmra.mrb[0].mxu0 %v986
  %v988 = vpop.f32.mrb[0].mxu0
  %v989 = vadd.f32 %v793, %v988
  %v990 = vpop.f32.mrb[0].mxu0
  %991 = vmatprep.mubr.f32.mxu0 0.0
  %v992 = vand.u32 %v206, 4294901760
  %v993 = vsub.f32 %v206, %v992
  %v994 = vand.u32 %v993, 4294901760
  %995 = vmatmul.mubr.f32.gmra.mrb[0].mxu0 %v994
  %v996 = vpop.f32.mrb[0].mxu0
  %v997 = vadd.f32 %v800, %v996
  %v998 = vpop.f32.mrb[0].mxu0
  %999 = vdwg.mxu0
  %1000 = vmatprep.subr.mxu0 0.0
  %v1001 = vand.u32 %v148, 4294901760
  %v1002 = vsub.f32 %v148, %v1001
  %v1003 = vand.u32 %v1002, 4294901760
  %1004 = vmatpush1.msra.mxu0 %v1003
  %1005 = vmatprep.subr.mxu0 0.0
  %v1006 = vand.u32 %v149, 4294901760
  %v1007 = vsub.f32 %v149, %v1006
  %v1008 = vand.u32 %v1007, 4294901760
  %1009 = vmatpush1.msra.mxu0 %v1008
  %1010 = vmatprep.subr.mxu0 0.0
  %v1011 = vand.u32 %v150, 4294901760
  %v1012 = vsub.f32 %v150, %v1011
  %v1013 = vand.u32 %v1012, 4294901760
  %1014 = vmatpush1.msra.mxu0 %v1013
  %1015 = vmatprep.subr.mxu0 0.0
  %v1016 = vand.u32 %v151, 4294901760
  %v1017 = vsub.f32 %v151, %v1016
  %v1018 = vand.u32 %v1017, 4294901760
  %1019 = vmatpush1.msra.mxu0 %v1018
  %1020 = vmatprep.subr.mxu0 0.0
  %1021 = vmatpush1.msra.mxu0 0.0
  %1022 = vmatprep.subr.mxu0 0.0
  %1023 = vmatpush1.msra.mxu0 0.0
  %1024 = vmatprep.subr.mxu0 0.0
  %1025 = vmatpush1.msra.mxu0 0.0
  %1026 = vmatprep.subr.mxu0 0.0
  %1027 = vmatpush1.msra.mxu0 0.0
  %1028 = vmatprep.subr.mxu0 0.0
  %1029 = vmatpush1.msra.mxu0 0.0
  %1030 = vmatprep.subr.mxu0 0.0
  %1031 = vmatpush1.msra.mxu0 0.0
  %1032 = vmatprep.subr.mxu0 0.0
  %1033 = vmatpush1.msra.mxu0 0.0
  %1034 = vmatprep.subr.mxu0 0.0
  %1035 = vmatpush1.msra.mxu0 0.0
  %1036 = vmatprep.subr.mxu0 0.0
  %1037 = vmatpush1.msra.mxu0 0.0
  %1038 = vmatprep.subr.mxu0 0.0
  %1039 = vmatpush1.msra.mxu0 0.0
  %1040 = vmatprep.subr.mxu0 0.0
  %1041 = vmatpush1.msra.mxu0 0.0
  %1042 = vmatprep.subr.mxu0 0.0
  %1043 = vmatpush1.msra.mxu0 0.0
  %1044 = vmatprep.subr.mxu0 0.0
  %1045 = vmatpush1.msra.mxu0 0.0
  %1046 = vmatprep.subr.mxu0 0.0
  %1047 = vmatpush1.msra.mxu0 0.0
  %1048 = vmatprep.subr.mxu0 0.0
  %1049 = vmatpush1.msra.mxu0 0.0
  %1050 = vmatprep.subr.mxu0 0.0
  %1051 = vmatpush1.msra.mxu0 0.0
  %1052 = vmatprep.subr.mxu0 0.0
  %1053 = vmatpush1.msra.mxu0 0.0
  %1054 = vmatprep.subr.mxu0 0.0
  %1055 = vmatpush1.msra.mxu0 0.0
  %1056 = vmatprep.subr.mxu0 0.0
  %1057 = vmatpush1.msra.mxu0 0.0
  %1058 = vmatprep.subr.mxu0 0.0
  %1059 = vmatpush1.msra.mxu0 0.0
  %1060 = vmatprep.subr.mxu0 0.0
  %1061 = vmatpush1.msra.mxu0 0.0
  %1062 = vmatprep.subr.mxu0 0.0
  %1063 = vmatpush1.msra.mxu0 0.0
  %1064 = vmatprep.subr.mxu0 0.0
  %1065 = vmatpush1.msra.mxu0 0.0
  %1066 = vmatprep.subr.mxu0 0.0
  %1067 = vmatpush1.msra.mxu0 0.0
  %1068 = vmatprep.subr.mxu0 0.0
  %1069 = vmatpush1.msra.mxu0 0.0
  %1070 = vmatprep.subr.mxu0 0.0
  %1071 = vmatpush1.msra.mxu0 0.0
  %1072 = vmatprep.subr.mxu0 0.0
  %1073 = vmatpush1.msra.mxu0 0.0
  %1074 = vmatprep.subr.mxu0 0.0
  %1075 = vmatpush1.msra.mxu0 0.0
  %1076 = vmatprep.mubr.f32.mxu0 0.0
  %v1077 = vand.u32 %v161, 4294901760
  %1078 = vmatmul.mubr.f32.gmra.mrb[0].mxu0 %v1077
  %v1079 = vpop.f32.mrb[0].mxu0
  %v1080 = vadd.f32 %v877, %v1079
  %v1081 = vpop.f32.mrb[0].mxu0
  %1082 = vmatprep.mubr.f32.mxu0 0.0
  %v1083 = vand.u32 %v164, 4294901760
  %1084 = vmatmul.mubr.f32.gmra.mrb[0].mxu0 %v1083
  %v1085 = vpop.f32.mrb[0].mxu0
  %v1086 = vadd.f32 %v885, %v1085
  %v1087 = vpop.f32.mrb[0].mxu0
  %1088 = vmatprep.mubr.f32.mxu0 0.0
  %v1089 = vand.u32 %v167, 4294901760
  %1090 = vmatmul.mubr.f32.gmra.mrb[0].mxu0 %v1089
  %v1091 = vpop.f32.mrb[0].mxu0
  %v1092 = vadd.f32 %v893, %v1091
  %v1093 = vpop.f32.mrb[0].mxu0
  %1094 = vmatprep.mubr.f32.mxu0 0.0
  %v1095 = vand.u32 %v170, 4294901760
  %1096 = vmatmul.mubr.f32.gmra.mrb[0].mxu0 %v1095
  %v1097 = vpop.f32.mrb[0].mxu0
  %v1098 = vadd.f32 %v901, %v1097
  %v1099 = vpop.f32.mrb[0].mxu0
  %1100 = vmatprep.mubr.f32.mxu0 0.0
  %v1101 = vand.u32 %v173, 4294901760
  %1102 = vmatmul.mubr.f32.gmra.mrb[0].mxu0 %v1101
  %v1103 = vpop.f32.mrb[0].mxu0
  %v1104 = vadd.f32 %v909, %v1103
  %v1105 = vpop.f32.mrb[0].mxu0
  %1106 = vmatprep.mubr.f32.mxu0 0.0
  %v1107 = vand.u32 %v176, 4294901760
  %1108 = vmatmul.mubr.f32.gmra.mrb[0].mxu0 %v1107
  %v1109 = vpop.f32.mrb[0].mxu0
  %v1110 = vadd.f32 %v917, %v1109
  %v1111 = vpop.f32.mrb[0].mxu0
  %1112 = vmatprep.mubr.f32.mxu0 0.0
  %v1113 = vand.u32 %v179, 4294901760
  %1114 = vmatmul.mubr.f32.gmra.mrb[0].mxu0 %v1113
  %v1115 = vpop.f32.mrb[0].mxu0
  %v1116 = vadd.f32 %v925, %v1115
  %v1117 = vpop.f32.mrb[0].mxu0
  %1118 = vmatprep.mubr.f32.mxu0 0.0
  %v1119 = vand.u32 %v182, 4294901760
  %1120 = vmatmul.mubr.f32.gmra.mrb[0].mxu0 %v1119
  %v1121 = vpop.f32.mrb[0].mxu0
  %v1122 = vadd.f32 %v933, %v1121
  %v1123 = vpop.f32.mrb[0].mxu0
  %1124 = vmatprep.mubr.f32.mxu0 0.0
  %v1125 = vand.u32 %v185, 4294901760
  %1126 = vmatmul.mubr.f32.gmra.mrb[0].mxu0 %v1125
  %v1127 = vpop.f32.mrb[0].mxu0
  %v1128 = vadd.f32 %v941, %v1127
  %v1129 = vpop.f32.mrb[0].mxu0
  %1130 = vmatprep.mubr.f32.mxu0 0.0
  %v1131 = vand.u32 %v188, 4294901760
  %1132 = vmatmul.mubr.f32.gmra.mrb[0].mxu0 %v1131
  %v1133 = vpop.f32.mrb[0].mxu0
  %v1134 = vadd.f32 %v949, %v1133
  %v1135 = vpop.f32.mrb[0].mxu0
  %1136 = vmatprep.mubr.f32.mxu0 0.0
  %v1137 = vand.u32 %v191, 4294901760
  %1138 = vmatmul.mubr.f32.gmra.mrb[0].mxu0 %v1137
  %v1139 = vpop.f32.mrb[0].mxu0
  %v1140 = vadd.f32 %v957, %v1139
  %v1141 = vpop.f32.mrb[0].mxu0
  %1142 = vmatprep.mubr.f32.mxu0 0.0
  %v1143 = vand.u32 %v194, 4294901760
  %1144 = vmatmul.mubr.f32.gmra.mrb[0].mxu0 %v1143
  %v1145 = vpop.f32.mrb[0].mxu0
  %v1146 = vadd.f32 %v965, %v1145
  %v1147 = vpop.f32.mrb[0].mxu0
  %1148 = vmatprep.mubr.f32.mxu0 0.0
  %v1149 = vand.u32 %v197, 4294901760
  %1150 = vmatmul.mubr.f32.gmra.mrb[0].mxu0 %v1149
  %v1151 = vpop.f32.mrb[0].mxu0
  %v1152 = vadd.f32 %v973, %v1151
  %v1153 = vpop.f32.mrb[0].mxu0
  %1154 = vmatprep.mubr.f32.mxu0 0.0
  %v1155 = vand.u32 %v200, 4294901760
  %1156 = vmatmul.mubr.f32.gmra.mrb[0].mxu0 %v1155
  %v1157 = vpop.f32.mrb[0].mxu0
  %v1158 = vadd.f32 %v981, %v1157
  %v1159 = vpop.f32.mrb[0].mxu0
  %1160 = vmatprep.mubr.f32.mxu0 0.0
  %v1161 = vand.u32 %v203, 4294901760
  %1162 = vmatmul.mubr.f32.gmra.mrb[0].mxu0 %v1161
  %v1163 = vpop.f32.mrb[0].mxu0
  %v1164 = vadd.f32 %v989, %v1163
  %v1165 = vpop.f32.mrb[0].mxu0
  %1166 = vmatprep.mubr.f32.mxu0 0.0
  %v1167 = vand.u32 %v206, 4294901760
  %1168 = vmatmul.mubr.f32.gmra.mrb[0].mxu0 %v1167
  %v1169 = vpop.f32.mrb[0].mxu0
  %v1170 = vadd.f32 %v997, %v1169
  %v1171 = vpop.f32.mrb[0].mxu0
  %1172 = vdwg.mxu0
  %1173 = vmatprep.subr.mxu0 0.0
  %v1174 = vand.u32 %v148, 4294901760
  %1175 = vmatpush1.msra.mxu0 %v1174
  %1176 = vmatprep.subr.mxu0 0.0
  %v1177 = vand.u32 %v149, 4294901760
  %1178 = vmatpush1.msra.mxu0 %v1177
  %1179 = vmatprep.subr.mxu0 0.0
  %v1180 = vand.u32 %v150, 4294901760
  %1181 = vmatpush1.msra.mxu0 %v1180
  %1182 = vmatprep.subr.mxu0 0.0
  %v1183 = vand.u32 %v151, 4294901760
  %1184 = vmatpush1.msra.mxu0 %v1183
  %1185 = vmatprep.subr.mxu0 0.0
  %1186 = vmatpush1.msra.mxu0 0.0
  %1187 = vmatprep.subr.mxu0 0.0
  %1188 = vmatpush1.msra.mxu0 0.0
  %1189 = vmatprep.subr.mxu0 0.0
  %1190 = vmatpush1.msra.mxu0 0.0
  %1191 = vmatprep.subr.mxu0 0.0
  %1192 = vmatpush1.msra.mxu0 0.0
  %1193 = vmatprep.subr.mxu0 0.0
  %1194 = vmatpush1.msra.mxu0 0.0
  %1195 = vmatprep.subr.mxu0 0.0
  %1196 = vmatpush1.msra.mxu0 0.0
  %1197 = vmatprep.subr.mxu0 0.0
  %1198 = vmatpush1.msra.mxu0 0.0
  %1199 = vmatprep.subr.mxu0 0.0
  %1200 = vmatpush1.msra.mxu0 0.0
  %1201 = vmatprep.subr.mxu0 0.0
  %1202 = vmatpush1.msra.mxu0 0.0
  %1203 = vmatprep.subr.mxu0 0.0
  %1204 = vmatpush1.msra.mxu0 0.0
  %1205 = vmatprep.subr.mxu0 0.0
  %1206 = vmatpush1.msra.mxu0 0.0
  %1207 = vmatprep.subr.mxu0 0.0
  %1208 = vmatpush1.msra.mxu0 0.0
  %1209 = vmatprep.subr.mxu0 0.0
  %1210 = vmatpush1.msra.mxu0 0.0
  %1211 = vmatprep.subr.mxu0 0.0
  %1212 = vmatpush1.msra.mxu0 0.0
  %1213 = vmatprep.subr.mxu0 0.0
  %1214 = vmatpush1.msra.mxu0 0.0
  %1215 = vmatprep.subr.mxu0 0.0
  %1216 = vmatpush1.msra.mxu0 0.0
  %1217 = vmatprep.subr.mxu0 0.0
  %1218 = vmatpush1.msra.mxu0 0.0
  %1219 = vmatprep.subr.mxu0 0.0
  %1220 = vmatpush1.msra.mxu0 0.0
  %1221 = vmatprep.subr.mxu0 0.0
  %1222 = vmatpush1.msra.mxu0 0.0
  %1223 = vmatprep.subr.mxu0 0.0
  %1224 = vmatpush1.msra.mxu0 0.0
  %1225 = vmatprep.subr.mxu0 0.0
  %1226 = vmatpush1.msra.mxu0 0.0
  %1227 = vmatprep.subr.mxu0 0.0
  %1228 = vmatpush1.msra.mxu0 0.0
  %1229 = vmatprep.subr.mxu0 0.0
  %1230 = vmatpush1.msra.mxu0 0.0
  %1231 = vmatprep.subr.mxu0 0.0
  %1232 = vmatpush1.msra.mxu0 0.0
  %1233 = vmatprep.subr.mxu0 0.0
  %1234 = vmatpush1.msra.mxu0 0.0
  %1235 = vmatprep.subr.mxu0 0.0
  %1236 = vmatpush1.msra.mxu0 0.0
  %1237 = vmatprep.subr.mxu0 0.0
  %1238 = vmatpush1.msra.mxu0 0.0
  %1239 = vmatprep.subr.mxu0 0.0
  %1240 = vmatpush1.msra.mxu0 0.0
  %1241 = vmatprep.mubr.f32.mxu0 0.0
  %v1242 = vand.u32 %v161, 4294901760
  %1243 = vmatmul.mubr.f32.gmra.mrb[0].mxu0 %v1242
  %v1244 = vpop.f32.mrb[0].mxu0
  %v1245 = vadd.f32 %v1080, %v1244
  %v1246 = vpop.f32.mrb[0].mxu0
  %1247 = vmatprep.mubr.f32.mxu0 0.0
  %v1248 = vand.u32 %v164, 4294901760
  %1249 = vmatmul.mubr.f32.gmra.mrb[0].mxu0 %v1248
  %v1250 = vpop.f32.mrb[0].mxu0
  %v1251 = vadd.f32 %v1086, %v1250
  %v1252 = vpop.f32.mrb[0].mxu0
  %1253 = vmatprep.mubr.f32.mxu0 0.0
  %v1254 = vand.u32 %v167, 4294901760
  %1255 = vmatmul.mubr.f32.gmra.mrb[0].mxu0 %v1254
  %v1256 = vpop.f32.mrb[0].mxu0
  %v1257 = vadd.f32 %v1092, %v1256
  %v1258 = vpop.f32.mrb[0].mxu0
  %1259 = vmatprep.mubr.f32.mxu0 0.0
  %v1260 = vand.u32 %v170, 4294901760
  %1261 = vmatmul.mubr.f32.gmra.mrb[0].mxu0 %v1260
  %v1262 = vpop.f32.mrb[0].mxu0
  %v1263 = vadd.f32 %v1098, %v1262
  %v1264 = vpop.f32.mrb[0].mxu0
  %1265 = vmatprep.mubr.f32.mxu0 0.0
  %v1266 = vand.u32 %v173, 4294901760
  %1267 = vmatmul.mubr.f32.gmra.mrb[0].mxu0 %v1266
  %v1268 = vpop.f32.mrb[0].mxu0
  %v1269 = vadd.f32 %v1104, %v1268
  %v1270 = vpop.f32.mrb[0].mxu0
  %1271 = vmatprep.mubr.f32.mxu0 0.0
  %v1272 = vand.u32 %v176, 4294901760
  %1273 = vmatmul.mubr.f32.gmra.mrb[0].mxu0 %v1272
  %v1274 = vpop.f32.mrb[0].mxu0
  %v1275 = vadd.f32 %v1110, %v1274
  %v1276 = vpop.f32.mrb[0].mxu0
  %1277 = vmatprep.mubr.f32.mxu0 0.0
  %v1278 = vand.u32 %v179, 4294901760
  %1279 = vmatmul.mubr.f32.gmra.mrb[0].mxu0 %v1278
  %v1280 = vpop.f32.mrb[0].mxu0
  %v1281 = vadd.f32 %v1116, %v1280
  %v1282 = vpop.f32.mrb[0].mxu0
  %1283 = vmatprep.mubr.f32.mxu0 0.0
  %v1284 = vand.u32 %v182, 4294901760
  %1285 = vmatmul.mubr.f32.gmra.mrb[0].mxu0 %v1284
  %v1286 = vpop.f32.mrb[0].mxu0
  %v1287 = vadd.f32 %v1122, %v1286
  %v1288 = vpop.f32.mrb[0].mxu0
  %1289 = vmatprep.mubr.f32.mxu0 0.0
  %v1290 = vand.u32 %v185, 4294901760
  %1291 = vmatmul.mubr.f32.gmra.mrb[0].mxu0 %v1290
  %v1292 = vpop.f32.mrb[0].mxu0
  %v1293 = vadd.f32 %v1128, %v1292
  %v1294 = vpop.f32.mrb[0].mxu0
  %1295 = vmatprep.mubr.f32.mxu0 0.0
  %v1296 = vand.u32 %v188, 4294901760
  %1297 = vmatmul.mubr.f32.gmra.mrb[0].mxu0 %v1296
  %v1298 = vpop.f32.mrb[0].mxu0
  %v1299 = vadd.f32 %v1134, %v1298
  %v1300 = vpop.f32.mrb[0].mxu0
  %1301 = vmatprep.mubr.f32.mxu0 0.0
  %v1302 = vand.u32 %v191, 4294901760
  %1303 = vmatmul.mubr.f32.gmra.mrb[0].mxu0 %v1302
  %v1304 = vpop.f32.mrb[0].mxu0
  %v1305 = vadd.f32 %v1140, %v1304
  %v1306 = vpop.f32.mrb[0].mxu0
  %1307 = vmatprep.mubr.f32.mxu0 0.0
  %v1308 = vand.u32 %v194, 4294901760
  %1309 = vmatmul.mubr.f32.gmra.mrb[0].mxu0 %v1308
  %v1310 = vpop.f32.mrb[0].mxu0
  %v1311 = vadd.f32 %v1146, %v1310
  %v1312 = vpop.f32.mrb[0].mxu0
  %1313 = vmatprep.mubr.f32.mxu0 0.0
  %v1314 = vand.u32 %v197, 4294901760
  %1315 = vmatmul.mubr.f32.gmra.mrb[0].mxu0 %v1314
  %v1316 = vpop.f32.mrb[0].mxu0
  %v1317 = vadd.f32 %v1152, %v1316
  %v1318 = vpop.f32.mrb[0].mxu0
  %1319 = vmatprep.mubr.f32.mxu0 0.0
  %v1320 = vand.u32 %v200, 4294901760
  %1321 = vmatmul.mubr.f32.gmra.mrb[0].mxu0 %v1320
  %v1322 = vpop.f32.mrb[0].mxu0
  %v1323 = vadd.f32 %v1158, %v1322
  %v1324 = vpop.f32.mrb[0].mxu0
  %1325 = vmatprep.mubr.f32.mxu0 0.0
  %v1326 = vand.u32 %v203, 4294901760
  %1327 = vmatmul.mubr.f32.gmra.mrb[0].mxu0 %v1326
  %v1328 = vpop.f32.mrb[0].mxu0
  %v1329 = vadd.f32 %v1164, %v1328
  %v1330 = vpop.f32.mrb[0].mxu0
  %1331 = vmatprep.mubr.f32.mxu0 0.0
  %v1332 = vand.u32 %v206, 4294901760
  %1333 = vmatmul.mubr.f32.gmra.mrb[0].mxu0 %v1332
  %v1334 = vpop.f32.mrb[0].mxu0
  %v1335 = vadd.f32 %v1170, %v1334
  %v1336 = vpop.f32.mrb[0].mxu0
  %1337 = vdwg.mxu0
  %v1338 = vxor.u32 %v1245, 2147483648
  %v1339 = vxor.u32 %v1251, 2147483648
  %v1340 = vxor.u32 %v1257, 2147483648
  %v1341 = vxor.u32 %v1263, 2147483648
  %v1342 = vxor.u32 %v1269, 2147483648
  %v1343 = vxor.u32 %v1275, 2147483648
  %v1344 = vxor.u32 %v1281, 2147483648
  %v1345 = vxor.u32 %v1287, 2147483648
  %v1346 = vxor.u32 %v1293, 2147483648
  %v1347 = vxor.u32 %v1299, 2147483648
  %v1348 = vxor.u32 %v1305, 2147483648
  %v1349 = vxor.u32 %v1311, 2147483648
  %v1350 = vxor.u32 %v1317, 2147483648
  %v1351 = vxor.u32 %v1323, 2147483648
  %v1352 = vxor.u32 %v1329, 2147483648
  %v1353 = vxor.u32 %v1335, 2147483648
  %v1354 = vmul.f32 %v1338, 1.442695
  %v1355 = vpow.pop %v1354
  %v1356 = vmul.f32 %v1339, 1.442695
  %v1357 = vpow.pop %v1356
  %v1358 = vmul.f32 %v1340, 1.442695
  %v1359 = vpow.pop %v1358
  %v1360 = vmul.f32 %v1341, 1.442695
  %v1361 = vpow.pop %v1360
  %v1362 = vmul.f32 %v1342, 1.442695
  %v1363 = vpow.pop %v1362
  %v1364 = vmul.f32 %v1343, 1.442695
  %v1365 = vpow.pop %v1364
  %v1366 = vmul.f32 %v1344, 1.442695
  %v1367 = vpow.pop %v1366
  %v1368 = vmul.f32 %v1345, 1.442695
  %v1369 = vpow.pop %v1368
  %v1370 = vmul.f32 %v1346, 1.442695
  %v1371 = vpow.pop %v1370
  %v1372 = vmul.f32 %v1347, 1.442695
  %v1373 = vpow.pop %v1372
  %v1374 = vmul.f32 %v1348, 1.442695
  %v1375 = vpow.pop %v1374
  %v1376 = vmul.f32 %v1349, 1.442695
  %v1377 = vpow.pop %v1376
  %v1378 = vmul.f32 %v1350, 1.442695
  %v1379 = vpow.pop %v1378
  %v1380 = vmul.f32 %v1351, 1.442695
  %v1381 = vpow.pop %v1380
  %v1382 = vmul.f32 %v1352, 1.442695
  %v1383 = vpow.pop %v1382
  %v1384 = vmul.f32 %v1353, 1.442695
  %v1385 = vpow.pop %v1384
  %v1386 = vadd.f32 %v1355, 1.0
  %v1387 = vadd.f32 %v1357, 1.0
  %v1388 = vadd.f32 %v1359, 1.0
  %v1389 = vadd.f32 %v1361, 1.0
  %v1390 = vadd.f32 %v1363, 1.0
  %v1391 = vadd.f32 %v1365, 1.0
  %v1392 = vadd.f32 %v1367, 1.0
  %v1393 = vadd.f32 %v1369, 1.0
  %v1394 = vadd.f32 %v1371, 1.0
  %v1395 = vadd.f32 %v1373, 1.0
  %v1396 = vadd.f32 %v1375, 1.0
  %v1397 = vadd.f32 %v1377, 1.0
  %v1398 = vadd.f32 %v1379, 1.0
  %v1399 = vadd.f32 %v1381, 1.0
  %v1400 = vadd.f32 %v1383, 1.0
  %v1401 = vadd.f32 %v1385, 1.0
  %v1402 = vrcp.pop %v1386
  %v1403 = vmul.f32 1.0, %v1402
  %v1404 = vrcp.pop %v1387
  %v1405 = vmul.f32 1.0, %v1404
  %v1406 = vrcp.pop %v1388
  %v1407 = vmul.f32 1.0, %v1406
  %v1408 = vrcp.pop %v1389
  %v1409 = vmul.f32 1.0, %v1408
  %v1410 = vrcp.pop %v1390
  %v1411 = vmul.f32 1.0, %v1410
  %v1412 = vrcp.pop %v1391
  %v1413 = vmul.f32 1.0, %v1412
  %v1414 = vrcp.pop %v1392
  %v1415 = vmul.f32 1.0, %v1414
  %v1416 = vrcp.pop %v1393
  %v1417 = vmul.f32 1.0, %v1416
  %v1418 = vrcp.pop %v1394
  %v1419 = vmul.f32 1.0, %v1418
  %v1420 = vrcp.pop %v1395
  %v1421 = vmul.f32 1.0, %v1420
  %v1422 = vrcp.pop %v1396
  %v1423 = vmul.f32 1.0, %v1422
  %v1424 = vrcp.pop %v1397
  %v1425 = vmul.f32 1.0, %v1424
  %v1426 = vrcp.pop %v1398
  %v1427 = vmul.f32 1.0, %v1426
  %v1428 = vrcp.pop %v1399
  %v1429 = vmul.f32 1.0, %v1428
  %v1430 = vrcp.pop %v1400
  %v1431 = vmul.f32 1.0, %v1430
  %v1432 = vrcp.pop %v1401
  %v1433 = vmul.f32 1.0, %v1432
  %v1434 = vmul.f32 %v1245, %v1403
  %v1435 = vmul.f32 %v1251, %v1405
  %v1436 = vmul.f32 %v1257, %v1407
  %v1437 = vmul.f32 %v1263, %v1409
  %v1438 = vmul.f32 %v1269, %v1411
  %v1439 = vmul.f32 %v1275, %v1413
  %v1440 = vmul.f32 %v1281, %v1415
  %v1441 = vmul.f32 %v1287, %v1417
  %v1442 = vmul.f32 %v1293, %v1419
  %v1443 = vmul.f32 %v1299, %v1421
  %v1444 = vmul.f32 %v1305, %v1423
  %v1445 = vmul.f32 %v1311, %v1425
  %v1446 = vmul.f32 %v1317, %v1427
  %v1447 = vmul.f32 %v1323, %v1429
  %v1448 = vmul.f32 %v1329, %v1431
  %v1449 = vmul.f32 %v1335, %v1433
  %v1450 = vld [vmem:[%s3] sm:$0xff]
  %v1451 = vld [vmem:[%s3 + $0x8] sm:$0xff]
  %v1452 = vld [vmem:[%s3 + $0x10] sm:$0xff]
  %v1453 = vld [vmem:[%s3 + $0x18] sm:$0xff]
  %v1454 = vld [vmem:[%s4] sm:$0x1]
  %v1456 = vlaneseq
  %v1457 = vshrl.u32 %v1456, 7
  %v1458 = vsub.s32 0, %v1457
  %v1459 = vrot.slane %v1454, %v1458
  %v1462 = vsel %vm159, %v1434, 0
  %v1465 = vsel %vm159, %v1435, 0
  %v1468 = vsel %vm159, %v1436, 0
  %v1471 = vsel %vm159, %v1437, 0
  %v1474 = vsel %vm159, %v1438, 0
  %v1477 = vsel %vm159, %v1439, 0
  %v1480 = vsel %vm159, %v1440, 0
  %v1483 = vsel %vm159, %v1441, 0
  %v1486 = vsel %vm159, %v1442, 0
  %v1489 = vsel %vm159, %v1443, 0
  %v1492 = vsel %vm159, %v1444, 0
  %v1495 = vsel %vm159, %v1445, 0
  %v1498 = vsel %vm159, %v1446, 0
  %v1501 = vsel %vm159, %v1447, 0
  %v1504 = vsel %vm159, %v1448, 0
  %v1507 = vsel %vm159, %v1449, 0
  %1509 = vmatprep.subr.mxu0 0.0
  %v1510 = vand.u32 %v1450, 4294901760
  %1511 = vmatpush1.msra.mxu0 %v1510
  %1512 = vmatprep.subr.mxu0 0.0
  %v1513 = vand.u32 %v1451, 4294901760
  %1514 = vmatpush1.msra.mxu0 %v1513
  %1515 = vmatprep.subr.mxu0 0.0
  %v1516 = vand.u32 %v1452, 4294901760
  %1517 = vmatpush1.msra.mxu0 %v1516
  %1518 = vmatprep.subr.mxu0 0.0
  %v1519 = vand.u32 %v1453, 4294901760
  %1520 = vmatpush1.msra.mxu0 %v1519
  %1521 = vmatprep.subr.mxu0 0.0
  %1522 = vmatpush1.msra.mxu0 0.0
  %1523 = vmatprep.subr.mxu0 0.0
  %1524 = vmatpush1.msra.mxu0 0.0
  %1525 = vmatprep.subr.mxu0 0.0
  %1526 = vmatpush1.msra.mxu0 0.0
  %1527 = vmatprep.subr.mxu0 0.0
  %1528 = vmatpush1.msra.mxu0 0.0
  %1529 = vmatprep.subr.mxu0 0.0
  %1530 = vmatpush1.msra.mxu0 0.0
  %1531 = vmatprep.subr.mxu0 0.0
  %1532 = vmatpush1.msra.mxu0 0.0
  %1533 = vmatprep.subr.mxu0 0.0
  %1534 = vmatpush1.msra.mxu0 0.0
  %1535 = vmatprep.subr.mxu0 0.0
  %1536 = vmatpush1.msra.mxu0 0.0
  %1537 = vmatprep.subr.mxu0 0.0
  %1538 = vmatpush1.msra.mxu0 0.0
  %1539 = vmatprep.subr.mxu0 0.0
  %1540 = vmatpush1.msra.mxu0 0.0
  %1541 = vmatprep.subr.mxu0 0.0
  %1542 = vmatpush1.msra.mxu0 0.0
  %1543 = vmatprep.subr.mxu0 0.0
  %1544 = vmatpush1.msra.mxu0 0.0
  %1545 = vmatprep.subr.mxu0 0.0
  %1546 = vmatpush1.msra.mxu0 0.0
  %1547 = vmatprep.subr.mxu0 0.0
  %1548 = vmatpush1.msra.mxu0 0.0
  %1549 = vmatprep.subr.mxu0 0.0
  %1550 = vmatpush1.msra.mxu0 0.0
  %1551 = vmatprep.subr.mxu0 0.0
  %1552 = vmatpush1.msra.mxu0 0.0
  %1553 = vmatprep.subr.mxu0 0.0
  %1554 = vmatpush1.msra.mxu0 0.0
  %1555 = vmatprep.subr.mxu0 0.0
  %1556 = vmatpush1.msra.mxu0 0.0
  %1557 = vmatprep.subr.mxu0 0.0
  %1558 = vmatpush1.msra.mxu0 0.0
  %1559 = vmatprep.subr.mxu0 0.0
  %1560 = vmatpush1.msra.mxu0 0.0
  %1561 = vmatprep.subr.mxu0 0.0
  %1562 = vmatpush1.msra.mxu0 0.0
  %1563 = vmatprep.subr.mxu0 0.0
  %1564 = vmatpush1.msra.mxu0 0.0
  %1565 = vmatprep.subr.mxu0 0.0
  %1566 = vmatpush1.msra.mxu0 0.0
  %1567 = vmatprep.subr.mxu0 0.0
  %1568 = vmatpush1.msra.mxu0 0.0
  %1569 = vmatprep.subr.mxu0 0.0
  %1570 = vmatpush1.msra.mxu0 0.0
  %1571 = vmatprep.subr.mxu0 0.0
  %1572 = vmatpush1.msra.mxu0 0.0
  %1573 = vmatprep.subr.mxu0 0.0
  %1574 = vmatpush1.msra.mxu0 0.0
  %1575 = vmatprep.subr.mxu0 0.0
  %1576 = vmatpush1.msra.mxu0 0.0
  %1577 = vmatprep.mubr.f32.mxu0 0.0
  %v1578 = vand.u32 %v1462, 4294901760
  %v1579 = vsub.f32 %v1462, %v1578
  %v1580 = vand.u32 %v1579, 4294901760
  %v1581 = vsub.f32 %v1579, %v1580
  %v1582 = vand.u32 %v1581, 4294901760
  %1583 = vmatmul.mubr.f32.gmra.mrb[0].mxu0 %v1582
  %v1584 = vpop.f32.mrb[0].mxu0
  %v1585 = vadd.f32 %v1459, %v1584
  %v1586 = vpop.f32.mrb[0].mxu0
  %1587 = vmatprep.mubr.f32.mxu0 0.0
  %v1588 = vand.u32 %v1465, 4294901760
  %v1589 = vsub.f32 %v1465, %v1588
  %v1590 = vand.u32 %v1589, 4294901760
  %v1591 = vsub.f32 %v1589, %v1590
  %v1592 = vand.u32 %v1591, 4294901760
  %1593 = vmatmul.mubr.f32.gmra.mrb[0].mxu0 %v1592
  %v1594 = vpop.f32.mrb[0].mxu0
  %v1595 = vadd.f32 %v1459, %v1594
  %v1596 = vpop.f32.mrb[0].mxu0
  %1597 = vmatprep.mubr.f32.mxu0 0.0
  %v1598 = vand.u32 %v1468, 4294901760
  %v1599 = vsub.f32 %v1468, %v1598
  %v1600 = vand.u32 %v1599, 4294901760
  %v1601 = vsub.f32 %v1599, %v1600
  %v1602 = vand.u32 %v1601, 4294901760
  %1603 = vmatmul.mubr.f32.gmra.mrb[0].mxu0 %v1602
  %v1604 = vpop.f32.mrb[0].mxu0
  %v1605 = vadd.f32 %v1459, %v1604
  %v1606 = vpop.f32.mrb[0].mxu0
  %1607 = vmatprep.mubr.f32.mxu0 0.0
  %v1608 = vand.u32 %v1471, 4294901760
  %v1609 = vsub.f32 %v1471, %v1608
  %v1610 = vand.u32 %v1609, 4294901760
  %v1611 = vsub.f32 %v1609, %v1610
  %v1612 = vand.u32 %v1611, 4294901760
  %1613 = vmatmul.mubr.f32.gmra.mrb[0].mxu0 %v1612
  %v1614 = vpop.f32.mrb[0].mxu0
  %v1615 = vadd.f32 %v1459, %v1614
  %v1616 = vpop.f32.mrb[0].mxu0
  %1617 = vmatprep.mubr.f32.mxu0 0.0
  %v1618 = vand.u32 %v1474, 4294901760
  %v1619 = vsub.f32 %v1474, %v1618
  %v1620 = vand.u32 %v1619, 4294901760
  %v1621 = vsub.f32 %v1619, %v1620
  %v1622 = vand.u32 %v1621, 4294901760
  %1623 = vmatmul.mubr.f32.gmra.mrb[0].mxu0 %v1622
  %v1624 = vpop.f32.mrb[0].mxu0
  %v1625 = vadd.f32 %v1459, %v1624
  %v1626 = vpop.f32.mrb[0].mxu0
  %1627 = vmatprep.mubr.f32.mxu0 0.0
  %v1628 = vand.u32 %v1477, 4294901760
  %v1629 = vsub.f32 %v1477, %v1628
  %v1630 = vand.u32 %v1629, 4294901760
  %v1631 = vsub.f32 %v1629, %v1630
  %v1632 = vand.u32 %v1631, 4294901760
  %1633 = vmatmul.mubr.f32.gmra.mrb[0].mxu0 %v1632
  %v1634 = vpop.f32.mrb[0].mxu0
  %v1635 = vadd.f32 %v1459, %v1634
  %v1636 = vpop.f32.mrb[0].mxu0
  %1637 = vmatprep.mubr.f32.mxu0 0.0
  %v1638 = vand.u32 %v1480, 4294901760
  %v1639 = vsub.f32 %v1480, %v1638
  %v1640 = vand.u32 %v1639, 4294901760
  %v1641 = vsub.f32 %v1639, %v1640
  %v1642 = vand.u32 %v1641, 4294901760
  %1643 = vmatmul.mubr.f32.gmra.mrb[0].mxu0 %v1642
  %v1644 = vpop.f32.mrb[0].mxu0
  %v1645 = vadd.f32 %v1459, %v1644
  %v1646 = vpop.f32.mrb[0].mxu0
  %1647 = vmatprep.mubr.f32.mxu0 0.0
  %v1648 = vand.u32 %v1483, 4294901760
  %v1649 = vsub.f32 %v1483, %v1648
  %v1650 = vand.u32 %v1649, 4294901760
  %v1651 = vsub.f32 %v1649, %v1650
  %v1652 = vand.u32 %v1651, 4294901760
  %1653 = vmatmul.mubr.f32.gmra.mrb[0].mxu0 %v1652
  %v1654 = vpop.f32.mrb[0].mxu0
  %v1655 = vadd.f32 %v1459, %v1654
  %v1656 = vpop.f32.mrb[0].mxu0
  %1657 = vmatprep.mubr.f32.mxu0 0.0
  %v1658 = vand.u32 %v1486, 4294901760
  %v1659 = vsub.f32 %v1486, %v1658
  %v1660 = vand.u32 %v1659, 4294901760
  %v1661 = vsub.f32 %v1659, %v1660
  %v1662 = vand.u32 %v1661, 4294901760
  %1663 = vmatmul.mubr.f32.gmra.mrb[0].mxu0 %v1662
  %v1664 = vpop.f32.mrb[0].mxu0
  %v1665 = vadd.f32 %v1459, %v1664
  %v1666 = vpop.f32.mrb[0].mxu0
  %1667 = vmatprep.mubr.f32.mxu0 0.0
  %v1668 = vand.u32 %v1489, 4294901760
  %v1669 = vsub.f32 %v1489, %v1668
  %v1670 = vand.u32 %v1669, 4294901760
  %v1671 = vsub.f32 %v1669, %v1670
  %v1672 = vand.u32 %v1671, 4294901760
  %1673 = vmatmul.mubr.f32.gmra.mrb[0].mxu0 %v1672
  %v1674 = vpop.f32.mrb[0].mxu0
  %v1675 = vadd.f32 %v1459, %v1674
  %v1676 = vpop.f32.mrb[0].mxu0
  %1677 = vmatprep.mubr.f32.mxu0 0.0
  %v1678 = vand.u32 %v1492, 4294901760
  %v1679 = vsub.f32 %v1492, %v1678
  %v1680 = vand.u32 %v1679, 4294901760
  %v1681 = vsub.f32 %v1679, %v1680
  %v1682 = vand.u32 %v1681, 4294901760
  %1683 = vmatmul.mubr.f32.gmra.mrb[0].mxu0 %v1682
  %v1684 = vpop.f32.mrb[0].mxu0
  %v1685 = vadd.f32 %v1459, %v1684
  %v1686 = vpop.f32.mrb[0].mxu0
  %1687 = vmatprep.mubr.f32.mxu0 0.0
  %v1688 = vand.u32 %v1495, 4294901760
  %v1689 = vsub.f32 %v1495, %v1688
  %v1690 = vand.u32 %v1689, 4294901760
  %v1691 = vsub.f32 %v1689, %v1690
  %v1692 = vand.u32 %v1691, 4294901760
  %1693 = vmatmul.mubr.f32.gmra.mrb[0].mxu0 %v1692
  %v1694 = vpop.f32.mrb[0].mxu0
  %v1695 = vadd.f32 %v1459, %v1694
  %v1696 = vpop.f32.mrb[0].mxu0
  %1697 = vmatprep.mubr.f32.mxu0 0.0
  %v1698 = vand.u32 %v1498, 4294901760
  %v1699 = vsub.f32 %v1498, %v1698
  %v1700 = vand.u32 %v1699, 4294901760
  %v1701 = vsub.f32 %v1699, %v1700
  %v1702 = vand.u32 %v1701, 4294901760
  %1703 = vmatmul.mubr.f32.gmra.mrb[0].mxu0 %v1702
  %v1704 = vpop.f32.mrb[0].mxu0
  %v1705 = vadd.f32 %v1459, %v1704
  %v1706 = vpop.f32.mrb[0].mxu0
  %1707 = vmatprep.mubr.f32.mxu0 0.0
  %v1708 = vand.u32 %v1501, 4294901760
  %v1709 = vsub.f32 %v1501, %v1708
  %v1710 = vand.u32 %v1709, 4294901760
  %v1711 = vsub.f32 %v1709, %v1710
  %v1712 = vand.u32 %v1711, 4294901760
  %1713 = vmatmul.mubr.f32.gmra.mrb[0].mxu0 %v1712
  %v1714 = vpop.f32.mrb[0].mxu0
  %v1715 = vadd.f32 %v1459, %v1714
  %v1716 = vpop.f32.mrb[0].mxu0
  %1717 = vmatprep.mubr.f32.mxu0 0.0
  %v1718 = vand.u32 %v1504, 4294901760
  %v1719 = vsub.f32 %v1504, %v1718
  %v1720 = vand.u32 %v1719, 4294901760
  %v1721 = vsub.f32 %v1719, %v1720
  %v1722 = vand.u32 %v1721, 4294901760
  %1723 = vmatmul.mubr.f32.gmra.mrb[0].mxu0 %v1722
  %v1724 = vpop.f32.mrb[0].mxu0
  %v1725 = vadd.f32 %v1459, %v1724
  %v1726 = vpop.f32.mrb[0].mxu0
  %1727 = vmatprep.mubr.f32.mxu0 0.0
  %v1728 = vand.u32 %v1507, 4294901760
  %v1729 = vsub.f32 %v1507, %v1728
  %v1730 = vand.u32 %v1729, 4294901760
  %v1731 = vsub.f32 %v1729, %v1730
  %v1732 = vand.u32 %v1731, 4294901760
  %1733 = vmatmul.mubr.f32.gmra.mrb[0].mxu0 %v1732
  %v1734 = vpop.f32.mrb[0].mxu0
  %v1735 = vadd.f32 %v1459, %v1734
  %v1736 = vpop.f32.mrb[0].mxu0
  %1737 = vdwg.mxu0
  %1738 = vmatprep.subr.mxu0 0.0
  %v1739 = vand.u32 %v1450, 4294901760
  %v1740 = vsub.f32 %v1450, %v1739
  %v1741 = vand.u32 %v1740, 4294901760
  %v1742 = vsub.f32 %v1740, %v1741
  %v1743 = vand.u32 %v1742, 4294901760
  %1744 = vmatpush1.msra.mxu0 %v1743
  %1745 = vmatprep.subr.mxu0 0.0
  %v1746 = vand.u32 %v1451, 4294901760
  %v1747 = vsub.f32 %v1451, %v1746
  %v1748 = vand.u32 %v1747, 4294901760
  %v1749 = vsub.f32 %v1747, %v1748
  %v1750 = vand.u32 %v1749, 4294901760
  %1751 = vmatpush1.msra.mxu0 %v1750
  %1752 = vmatprep.subr.mxu0 0.0
  %v1753 = vand.u32 %v1452, 4294901760
  %v1754 = vsub.f32 %v1452, %v1753
  %v1755 = vand.u32 %v1754, 4294901760
  %v1756 = vsub.f32 %v1754, %v1755
  %v1757 = vand.u32 %v1756, 4294901760
  %1758 = vmatpush1.msra.mxu0 %v1757
  %1759 = vmatprep.subr.mxu0 0.0
  %v1760 = vand.u32 %v1453, 4294901760
  %v1761 = vsub.f32 %v1453, %v1760
  %v1762 = vand.u32 %v1761, 4294901760
  %v1763 = vsub.f32 %v1761, %v1762
  %v1764 = vand.u32 %v1763, 4294901760
  %1765 = vmatpush1.msra.mxu0 %v1764
  %1766 = vmatprep.subr.mxu0 0.0
  %1767 = vmatpush1.msra.mxu0 0.0
  %1768 = vmatprep.subr.mxu0 0.0
  %1769 = vmatpush1.msra.mxu0 0.0
  %1770 = vmatprep.subr.mxu0 0.0
  %1771 = vmatpush1.msra.mxu0 0.0
  %1772 = vmatprep.subr.mxu0 0.0
  %1773 = vmatpush1.msra.mxu0 0.0
  %1774 = vmatprep.subr.mxu0 0.0
  %1775 = vmatpush1.msra.mxu0 0.0
  %1776 = vmatprep.subr.mxu0 0.0
  %1777 = vmatpush1.msra.mxu0 0.0
  %1778 = vmatprep.subr.mxu0 0.0
  %1779 = vmatpush1.msra.mxu0 0.0
  %1780 = vmatprep.subr.mxu0 0.0
  %1781 = vmatpush1.msra.mxu0 0.0
  %1782 = vmatprep.subr.mxu0 0.0
  %1783 = vmatpush1.msra.mxu0 0.0
  %1784 = vmatprep.subr.mxu0 0.0
  %1785 = vmatpush1.msra.mxu0 0.0
  %1786 = vmatprep.subr.mxu0 0.0
  %1787 = vmatpush1.msra.mxu0 0.0
  %1788 = vmatprep.subr.mxu0 0.0
  %1789 = vmatpush1.msra.mxu0 0.0
  %1790 = vmatprep.subr.mxu0 0.0
  %1791 = vmatpush1.msra.mxu0 0.0
  %1792 = vmatprep.subr.mxu0 0.0
  %1793 = vmatpush1.msra.mxu0 0.0
  %1794 = vmatprep.subr.mxu0 0.0
  %1795 = vmatpush1.msra.mxu0 0.0
  %1796 = vmatprep.subr.mxu0 0.0
  %1797 = vmatpush1.msra.mxu0 0.0
  %1798 = vmatprep.subr.mxu0 0.0
  %1799 = vmatpush1.msra.mxu0 0.0
  %1800 = vmatprep.subr.mxu0 0.0
  %1801 = vmatpush1.msra.mxu0 0.0
  %1802 = vmatprep.subr.mxu0 0.0
  %1803 = vmatpush1.msra.mxu0 0.0
  %1804 = vmatprep.subr.mxu0 0.0
  %1805 = vmatpush1.msra.mxu0 0.0
  %1806 = vmatprep.subr.mxu0 0.0
  %1807 = vmatpush1.msra.mxu0 0.0
  %1808 = vmatprep.subr.mxu0 0.0
  %1809 = vmatpush1.msra.mxu0 0.0
  %1810 = vmatprep.subr.mxu0 0.0
  %1811 = vmatpush1.msra.mxu0 0.0
  %1812 = vmatprep.subr.mxu0 0.0
  %1813 = vmatpush1.msra.mxu0 0.0
  %1814 = vmatprep.subr.mxu0 0.0
  %1815 = vmatpush1.msra.mxu0 0.0
  %1816 = vmatprep.subr.mxu0 0.0
  %1817 = vmatpush1.msra.mxu0 0.0
  %1818 = vmatprep.subr.mxu0 0.0
  %1819 = vmatpush1.msra.mxu0 0.0
  %1820 = vmatprep.subr.mxu0 0.0
  %1821 = vmatpush1.msra.mxu0 0.0
  %1822 = vmatprep.mubr.f32.mxu0 0.0
  %v1823 = vand.u32 %v1462, 4294901760
  %1824 = vmatmul.mubr.f32.gmra.mrb[0].mxu0 %v1823
  %v1825 = vpop.f32.mrb[0].mxu0
  %v1826 = vadd.f32 %v1585, %v1825
  %v1827 = vpop.f32.mrb[0].mxu0
  %1828 = vmatprep.mubr.f32.mxu0 0.0
  %v1829 = vand.u32 %v1465, 4294901760
  %1830 = vmatmul.mubr.f32.gmra.mrb[0].mxu0 %v1829
  %v1831 = vpop.f32.mrb[0].mxu0
  %v1832 = vadd.f32 %v1595, %v1831
  %v1833 = vpop.f32.mrb[0].mxu0
  %1834 = vmatprep.mubr.f32.mxu0 0.0
  %v1835 = vand.u32 %v1468, 4294901760
  %1836 = vmatmul.mubr.f32.gmra.mrb[0].mxu0 %v1835
  %v1837 = vpop.f32.mrb[0].mxu0
  %v1838 = vadd.f32 %v1605, %v1837
  %v1839 = vpop.f32.mrb[0].mxu0
  %1840 = vmatprep.mubr.f32.mxu0 0.0
  %v1841 = vand.u32 %v1471, 4294901760
  %1842 = vmatmul.mubr.f32.gmra.mrb[0].mxu0 %v1841
  %v1843 = vpop.f32.mrb[0].mxu0
  %v1844 = vadd.f32 %v1615, %v1843
  %v1845 = vpop.f32.mrb[0].mxu0
  %1846 = vmatprep.mubr.f32.mxu0 0.0
  %v1847 = vand.u32 %v1474, 4294901760
  %1848 = vmatmul.mubr.f32.gmra.mrb[0].mxu0 %v1847
  %v1849 = vpop.f32.mrb[0].mxu0
  %v1850 = vadd.f32 %v1625, %v1849
  %v1851 = vpop.f32.mrb[0].mxu0
  %1852 = vmatprep.mubr.f32.mxu0 0.0
  %v1853 = vand.u32 %v1477, 4294901760
  %1854 = vmatmul.mubr.f32.gmra.mrb[0].mxu0 %v1853
  %v1855 = vpop.f32.mrb[0].mxu0
  %v1856 = vadd.f32 %v1635, %v1855
  %v1857 = vpop.f32.mrb[0].mxu0
  %1858 = vmatprep.mubr.f32.mxu0 0.0
  %v1859 = vand.u32 %v1480, 4294901760
  %1860 = vmatmul.mubr.f32.gmra.mrb[0].mxu0 %v1859
  %v1861 = vpop.f32.mrb[0].mxu0
  %v1862 = vadd.f32 %v1645, %v1861
  %v1863 = vpop.f32.mrb[0].mxu0
  %1864 = vmatprep.mubr.f32.mxu0 0.0
  %v1865 = vand.u32 %v1483, 4294901760
  %1866 = vmatmul.mubr.f32.gmra.mrb[0].mxu0 %v1865
  %v1867 = vpop.f32.mrb[0].mxu0
  %v1868 = vadd.f32 %v1655, %v1867
  %v1869 = vpop.f32.mrb[0].mxu0
  %1870 = vmatprep.mubr.f32.mxu0 0.0
  %v1871 = vand.u32 %v1486, 4294901760
  %1872 = vmatmul.mubr.f32.gmra.mrb[0].mxu0 %v1871
  %v1873 = vpop.f32.mrb[0].mxu0
  %v1874 = vadd.f32 %v1665, %v1873
  %v1875 = vpop.f32.mrb[0].mxu0
  %1876 = vmatprep.mubr.f32.mxu0 0.0
  %v1877 = vand.u32 %v1489, 4294901760
  %1878 = vmatmul.mubr.f32.gmra.mrb[0].mxu0 %v1877
  %v1879 = vpop.f32.mrb[0].mxu0
  %v1880 = vadd.f32 %v1675, %v1879
  %v1881 = vpop.f32.mrb[0].mxu0
  %1882 = vmatprep.mubr.f32.mxu0 0.0
  %v1883 = vand.u32 %v1492, 4294901760
  %1884 = vmatmul.mubr.f32.gmra.mrb[0].mxu0 %v1883
  %v1885 = vpop.f32.mrb[0].mxu0
  %v1886 = vadd.f32 %v1685, %v1885
  %v1887 = vpop.f32.mrb[0].mxu0
  %1888 = vmatprep.mubr.f32.mxu0 0.0
  %v1889 = vand.u32 %v1495, 4294901760
  %1890 = vmatmul.mubr.f32.gmra.mrb[0].mxu0 %v1889
  %v1891 = vpop.f32.mrb[0].mxu0
  %v1892 = vadd.f32 %v1695, %v1891
  %v1893 = vpop.f32.mrb[0].mxu0
  %1894 = vmatprep.mubr.f32.mxu0 0.0
  %v1895 = vand.u32 %v1498, 4294901760
  %1896 = vmatmul.mubr.f32.gmra.mrb[0].mxu0 %v1895
  %v1897 = vpop.f32.mrb[0].mxu0
  %v1898 = vadd.f32 %v1705, %v1897
  %v1899 = vpop.f32.mrb[0].mxu0
  %1900 = vmatprep.mubr.f32.mxu0 0.0
  %v1901 = vand.u32 %v1501, 4294901760
  %1902 = vmatmul.mubr.f32.gmra.mrb[0].mxu0 %v1901
  %v1903 = vpop.f32.mrb[0].mxu0
  %v1904 = vadd.f32 %v1715, %v1903
  %v1905 = vpop.f32.mrb[0].mxu0
  %1906 = vmatprep.mubr.f32.mxu0 0.0
  %v1907 = vand.u32 %v1504, 4294901760
  %1908 = vmatmul.mubr.f32.gmra.mrb[0].mxu0 %v1907
  %v1909 = vpop.f32.mrb[0].mxu0
  %v1910 = vadd.f32 %v1725, %v1909
  %v1911 = vpop.f32.mrb[0].mxu0
  %1912 = vmatprep.mubr.f32.mxu0 0.0
  %v1913 = vand.u32 %v1507, 4294901760
  %1914 = vmatmul.mubr.f32.gmra.mrb[0].mxu0 %v1913
  %v1915 = vpop.f32.mrb[0].mxu0
  %v1916 = vadd.f32 %v1735, %v1915
  %v1917 = vpop.f32.mrb[0].mxu0
  %1918 = vdwg.mxu0
  %1919 = vmatprep.subr.mxu0 0.0
  %v1920 = vand.u32 %v1450, 4294901760
  %v1921 = vsub.f32 %v1450, %v1920
  %1922 = vmatpush1.msra.mxu0 %v1921
  %1923 = vmatprep.subr.mxu0 0.0
  %v1924 = vand.u32 %v1451, 4294901760
  %v1925 = vsub.f32 %v1451, %v1924
  %1926 = vmatpush1.msra.mxu0 %v1925
  %1927 = vmatprep.subr.mxu0 0.0
  %v1928 = vand.u32 %v1452, 4294901760
  %v1929 = vsub.f32 %v1452, %v1928
  %1930 = vmatpush1.msra.mxu0 %v1929
  %1931 = vmatprep.subr.mxu0 0.0
  %v1932 = vand.u32 %v1453, 4294901760
  %v1933 = vsub.f32 %v1453, %v1932
  %1934 = vmatpush1.msra.mxu0 %v1933
  %1935 = vmatprep.subr.mxu0 0.0
  %1936 = vmatpush1.msra.mxu0 0.0
  %1937 = vmatprep.subr.mxu0 0.0
  %1938 = vmatpush1.msra.mxu0 0.0
  %1939 = vmatprep.subr.mxu0 0.0
  %1940 = vmatpush1.msra.mxu0 0.0
  %1941 = vmatprep.subr.mxu0 0.0
  %1942 = vmatpush1.msra.mxu0 0.0
  %1943 = vmatprep.subr.mxu0 0.0
  %1944 = vmatpush1.msra.mxu0 0.0
  %1945 = vmatprep.subr.mxu0 0.0
  %1946 = vmatpush1.msra.mxu0 0.0
  %1947 = vmatprep.subr.mxu0 0.0
  %1948 = vmatpush1.msra.mxu0 0.0
  %1949 = vmatprep.subr.mxu0 0.0
  %1950 = vmatpush1.msra.mxu0 0.0
  %1951 = vmatprep.subr.mxu0 0.0
  %1952 = vmatpush1.msra.mxu0 0.0
  %1953 = vmatprep.subr.mxu0 0.0
  %1954 = vmatpush1.msra.mxu0 0.0
  %1955 = vmatprep.subr.mxu0 0.0
  %1956 = vmatpush1.msra.mxu0 0.0
  %1957 = vmatprep.subr.mxu0 0.0
  %1958 = vmatpush1.msra.mxu0 0.0
  %1959 = vmatprep.subr.mxu0 0.0
  %1960 = vmatpush1.msra.mxu0 0.0
  %1961 = vmatprep.subr.mxu0 0.0
  %1962 = vmatpush1.msra.mxu0 0.0
  %1963 = vmatprep.subr.mxu0 0.0
  %1964 = vmatpush1.msra.mxu0 0.0
  %1965 = vmatprep.subr.mxu0 0.0
  %1966 = vmatpush1.msra.mxu0 0.0
  %1967 = vmatprep.subr.mxu0 0.0
  %1968 = vmatpush1.msra.mxu0 0.0
  %1969 = vmatprep.subr.mxu0 0.0
  %1970 = vmatpush1.msra.mxu0 0.0
  %1971 = vmatprep.subr.mxu0 0.0
  %1972 = vmatpush1.msra.mxu0 0.0
  %1973 = vmatprep.subr.mxu0 0.0
  %1974 = vmatpush1.msra.mxu0 0.0
  %1975 = vmatprep.subr.mxu0 0.0
  %1976 = vmatpush1.msra.mxu0 0.0
  %1977 = vmatprep.subr.mxu0 0.0
  %1978 = vmatpush1.msra.mxu0 0.0
  %1979 = vmatprep.subr.mxu0 0.0
  %1980 = vmatpush1.msra.mxu0 0.0
  %1981 = vmatprep.subr.mxu0 0.0
  %1982 = vmatpush1.msra.mxu0 0.0
  %1983 = vmatprep.subr.mxu0 0.0
  %1984 = vmatpush1.msra.mxu0 0.0
  %1985 = vmatprep.subr.mxu0 0.0
  %1986 = vmatpush1.msra.mxu0 0.0
  %1987 = vmatprep.subr.mxu0 0.0
  %1988 = vmatpush1.msra.mxu0 0.0
  %1989 = vmatprep.subr.mxu0 0.0
  %1990 = vmatpush1.msra.mxu0 0.0
  %1991 = vmatprep.mubr.f32.mxu0 0.0
  %v1992 = vand.u32 %v1462, 4294901760
  %v1993 = vsub.f32 %v1462, %v1992
  %1994 = vmatmul.mubr.f32.gmra.mrb[0].mxu0 %v1993
  %v1995 = vpop.f32.mrb[0].mxu0
  %v1996 = vadd.f32 %v1826, %v1995
  %v1997 = vpop.f32.mrb[0].mxu0
  %1998 = vmatprep.mubr.f32.mxu0 0.0
  %v1999 = vand.u32 %v1465, 4294901760
  %v2000 = vsub.f32 %v1465, %v1999
  %2001 = vmatmul.mubr.f32.gmra.mrb[0].mxu0 %v2000
  %v2002 = vpop.f32.mrb[0].mxu0
  %v2003 = vadd.f32 %v1832, %v2002
  %v2004 = vpop.f32.mrb[0].mxu0
  %2005 = vmatprep.mubr.f32.mxu0 0.0
  %v2006 = vand.u32 %v1468, 4294901760
  %v2007 = vsub.f32 %v1468, %v2006
  %2008 = vmatmul.mubr.f32.gmra.mrb[0].mxu0 %v2007
  %v2009 = vpop.f32.mrb[0].mxu0
  %v2010 = vadd.f32 %v1838, %v2009
  %v2011 = vpop.f32.mrb[0].mxu0
  %2012 = vmatprep.mubr.f32.mxu0 0.0
  %v2013 = vand.u32 %v1471, 4294901760
  %v2014 = vsub.f32 %v1471, %v2013
  %2015 = vmatmul.mubr.f32.gmra.mrb[0].mxu0 %v2014
  %v2016 = vpop.f32.mrb[0].mxu0
  %v2017 = vadd.f32 %v1844, %v2016
  %v2018 = vpop.f32.mrb[0].mxu0
  %2019 = vmatprep.mubr.f32.mxu0 0.0
  %v2020 = vand.u32 %v1474, 4294901760
  %v2021 = vsub.f32 %v1474, %v2020
  %2022 = vmatmul.mubr.f32.gmra.mrb[0].mxu0 %v2021
  %v2023 = vpop.f32.mrb[0].mxu0
  %v2024 = vadd.f32 %v1850, %v2023
  %v2025 = vpop.f32.mrb[0].mxu0
  %2026 = vmatprep.mubr.f32.mxu0 0.0
  %v2027 = vand.u32 %v1477, 4294901760
  %v2028 = vsub.f32 %v1477, %v2027
  %2029 = vmatmul.mubr.f32.gmra.mrb[0].mxu0 %v2028
  %v2030 = vpop.f32.mrb[0].mxu0
  %v2031 = vadd.f32 %v1856, %v2030
  %v2032 = vpop.f32.mrb[0].mxu0
  %2033 = vmatprep.mubr.f32.mxu0 0.0
  %v2034 = vand.u32 %v1480, 4294901760
  %v2035 = vsub.f32 %v1480, %v2034
  %2036 = vmatmul.mubr.f32.gmra.mrb[0].mxu0 %v2035
  %v2037 = vpop.f32.mrb[0].mxu0
  %v2038 = vadd.f32 %v1862, %v2037
  %v2039 = vpop.f32.mrb[0].mxu0
  %2040 = vmatprep.mubr.f32.mxu0 0.0
  %v2041 = vand.u32 %v1483, 4294901760
  %v2042 = vsub.f32 %v1483, %v2041
  %2043 = vmatmul.mubr.f32.gmra.mrb[0].mxu0 %v2042
  %v2044 = vpop.f32.mrb[0].mxu0
  %v2045 = vadd.f32 %v1868, %v2044
  %v2046 = vpop.f32.mrb[0].mxu0
  %2047 = vmatprep.mubr.f32.mxu0 0.0
  %v2048 = vand.u32 %v1486, 4294901760
  %v2049 = vsub.f32 %v1486, %v2048
  %2050 = vmatmul.mubr.f32.gmra.mrb[0].mxu0 %v2049
  %v2051 = vpop.f32.mrb[0].mxu0
  %v2052 = vadd.f32 %v1874, %v2051
  %v2053 = vpop.f32.mrb[0].mxu0
  %2054 = vmatprep.mubr.f32.mxu0 0.0
  %v2055 = vand.u32 %v1489, 4294901760
  %v2056 = vsub.f32 %v1489, %v2055
  %2057 = vmatmul.mubr.f32.gmra.mrb[0].mxu0 %v2056
  %v2058 = vpop.f32.mrb[0].mxu0
  %v2059 = vadd.f32 %v1880, %v2058
  %v2060 = vpop.f32.mrb[0].mxu0
  %2061 = vmatprep.mubr.f32.mxu0 0.0
  %v2062 = vand.u32 %v1492, 4294901760
  %v2063 = vsub.f32 %v1492, %v2062
  %2064 = vmatmul.mubr.f32.gmra.mrb[0].mxu0 %v2063
  %v2065 = vpop.f32.mrb[0].mxu0
  %v2066 = vadd.f32 %v1886, %v2065
  %v2067 = vpop.f32.mrb[0].mxu0
  %2068 = vmatprep.mubr.f32.mxu0 0.0
  %v2069 = vand.u32 %v1495, 4294901760
  %v2070 = vsub.f32 %v1495, %v2069
  %2071 = vmatmul.mubr.f32.gmra.mrb[0].mxu0 %v2070
  %v2072 = vpop.f32.mrb[0].mxu0
  %v2073 = vadd.f32 %v1892, %v2072
  %v2074 = vpop.f32.mrb[0].mxu0
  %2075 = vmatprep.mubr.f32.mxu0 0.0
  %v2076 = vand.u32 %v1498, 4294901760
  %v2077 = vsub.f32 %v1498, %v2076
  %2078 = vmatmul.mubr.f32.gmra.mrb[0].mxu0 %v2077
  %v2079 = vpop.f32.mrb[0].mxu0
  %v2080 = vadd.f32 %v1898, %v2079
  %v2081 = vpop.f32.mrb[0].mxu0
  %2082 = vmatprep.mubr.f32.mxu0 0.0
  %v2083 = vand.u32 %v1501, 4294901760
  %v2084 = vsub.f32 %v1501, %v2083
  %2085 = vmatmul.mubr.f32.gmra.mrb[0].mxu0 %v2084
  %v2086 = vpop.f32.mrb[0].mxu0
  %v2087 = vadd.f32 %v1904, %v2086
  %v2088 = vpop.f32.mrb[0].mxu0
  %2089 = vmatprep.mubr.f32.mxu0 0.0
  %v2090 = vand.u32 %v1504, 4294901760
  %v2091 = vsub.f32 %v1504, %v2090
  %2092 = vmatmul.mubr.f32.gmra.mrb[0].mxu0 %v2091
  %v2093 = vpop.f32.mrb[0].mxu0
  %v2094 = vadd.f32 %v1910, %v2093
  %v2095 = vpop.f32.mrb[0].mxu0
  %2096 = vmatprep.mubr.f32.mxu0 0.0
  %v2097 = vand.u32 %v1507, 4294901760
  %v2098 = vsub.f32 %v1507, %v2097
  %2099 = vmatmul.mubr.f32.gmra.mrb[0].mxu0 %v2098
  %v2100 = vpop.f32.mrb[0].mxu0
  %v2101 = vadd.f32 %v1916, %v2100
  %v2102 = vpop.f32.mrb[0].mxu0
  %2103 = vdwg.mxu0
  %2104 = vmatprep.subr.mxu0 0.0
  %v2105 = vand.u32 %v1450, 4294901760
  %2106 = vmatpush1.msra.mxu0 %v2105
  %2107 = vmatprep.subr.mxu0 0.0
  %v2108 = vand.u32 %v1451, 4294901760
  %2109 = vmatpush1.msra.mxu0 %v2108
  %2110 = vmatprep.subr.mxu0 0.0
  %v2111 = vand.u32 %v1452, 4294901760
  %2112 = vmatpush1.msra.mxu0 %v2111
  %2113 = vmatprep.subr.mxu0 0.0
  %v2114 = vand.u32 %v1453, 4294901760
  %2115 = vmatpush1.msra.mxu0 %v2114
  %2116 = vmatprep.subr.mxu0 0.0
  %2117 = vmatpush1.msra.mxu0 0.0
  %2118 = vmatprep.subr.mxu0 0.0
  %2119 = vmatpush1.msra.mxu0 0.0
  %2120 = vmatprep.subr.mxu0 0.0
  %2121 = vmatpush1.msra.mxu0 0.0
  %2122 = vmatprep.subr.mxu0 0.0
  %2123 = vmatpush1.msra.mxu0 0.0
  %2124 = vmatprep.subr.mxu0 0.0
  %2125 = vmatpush1.msra.mxu0 0.0
  %2126 = vmatprep.subr.mxu0 0.0
  %2127 = vmatpush1.msra.mxu0 0.0
  %2128 = vmatprep.subr.mxu0 0.0
  %2129 = vmatpush1.msra.mxu0 0.0
  %2130 = vmatprep.subr.mxu0 0.0
  %2131 = vmatpush1.msra.mxu0 0.0
  %2132 = vmatprep.subr.mxu0 0.0
  %2133 = vmatpush1.msra.mxu0 0.0
  %2134 = vmatprep.subr.mxu0 0.0
  %2135 = vmatpush1.msra.mxu0 0.0
  %2136 = vmatprep.subr.mxu0 0.0
  %2137 = vmatpush1.msra.mxu0 0.0
  %2138 = vmatprep.subr.mxu0 0.0
  %2139 = vmatpush1.msra.mxu0 0.0
  %2140 = vmatprep.subr.mxu0 0.0
  %2141 = vmatpush1.msra.mxu0 0.0
  %2142 = vmatprep.subr.mxu0 0.0
  %2143 = vmatpush1.msra.mxu0 0.0
  %2144 = vmatprep.subr.mxu0 0.0
  %2145 = vmatpush1.msra.mxu0 0.0
  %2146 = vmatprep.subr.mxu0 0.0
  %2147 = vmatpush1.msra.mxu0 0.0
  %2148 = vmatprep.subr.mxu0 0.0
  %2149 = vmatpush1.msra.mxu0 0.0
  %2150 = vmatprep.subr.mxu0 0.0
  %2151 = vmatpush1.msra.mxu0 0.0
  %2152 = vmatprep.subr.mxu0 0.0
  %2153 = vmatpush1.msra.mxu0 0.0
  %2154 = vmatprep.subr.mxu0 0.0
  %2155 = vmatpush1.msra.mxu0 0.0
  %2156 = vmatprep.subr.mxu0 0.0
  %2157 = vmatpush1.msra.mxu0 0.0
  %2158 = vmatprep.subr.mxu0 0.0
  %2159 = vmatpush1.msra.mxu0 0.0
  %2160 = vmatprep.subr.mxu0 0.0
  %2161 = vmatpush1.msra.mxu0 0.0
  %2162 = vmatprep.subr.mxu0 0.0
  %2163 = vmatpush1.msra.mxu0 0.0
  %2164 = vmatprep.subr.mxu0 0.0
  %2165 = vmatpush1.msra.mxu0 0.0
  %2166 = vmatprep.subr.mxu0 0.0
  %2167 = vmatpush1.msra.mxu0 0.0
  %2168 = vmatprep.subr.mxu0 0.0
  %2169 = vmatpush1.msra.mxu0 0.0
  %2170 = vmatprep.subr.mxu0 0.0
  %2171 = vmatpush1.msra.mxu0 0.0
  %2172 = vmatprep.mubr.f32.mxu0 0.0
  %v2173 = vand.u32 %v1462, 4294901760
  %v2174 = vsub.f32 %v1462, %v2173
  %v2175 = vand.u32 %v2174, 4294901760
  %2176 = vmatmul.mubr.f32.gmra.mrb[0].mxu0 %v2175
  %v2177 = vpop.f32.mrb[0].mxu0
  %v2178 = vadd.f32 %v1996, %v2177
  %v2179 = vpop.f32.mrb[0].mxu0
  %2180 = vmatprep.mubr.f32.mxu0 0.0
  %v2181 = vand.u32 %v1465, 4294901760
  %v2182 = vsub.f32 %v1465, %v2181
  %v2183 = vand.u32 %v2182, 4294901760
  %2184 = vmatmul.mubr.f32.gmra.mrb[0].mxu0 %v2183
  %v2185 = vpop.f32.mrb[0].mxu0
  %v2186 = vadd.f32 %v2003, %v2185
  %v2187 = vpop.f32.mrb[0].mxu0
  %2188 = vmatprep.mubr.f32.mxu0 0.0
  %v2189 = vand.u32 %v1468, 4294901760
  %v2190 = vsub.f32 %v1468, %v2189
  %v2191 = vand.u32 %v2190, 4294901760
  %2192 = vmatmul.mubr.f32.gmra.mrb[0].mxu0 %v2191
  %v2193 = vpop.f32.mrb[0].mxu0
  %v2194 = vadd.f32 %v2010, %v2193
  %v2195 = vpop.f32.mrb[0].mxu0
  %2196 = vmatprep.mubr.f32.mxu0 0.0
  %v2197 = vand.u32 %v1471, 4294901760
  %v2198 = vsub.f32 %v1471, %v2197
  %v2199 = vand.u32 %v2198, 4294901760
  %2200 = vmatmul.mubr.f32.gmra.mrb[0].mxu0 %v2199
  %v2201 = vpop.f32.mrb[0].mxu0
  %v2202 = vadd.f32 %v2017, %v2201
  %v2203 = vpop.f32.mrb[0].mxu0
  %2204 = vmatprep.mubr.f32.mxu0 0.0
  %v2205 = vand.u32 %v1474, 4294901760
  %v2206 = vsub.f32 %v1474, %v2205
  %v2207 = vand.u32 %v2206, 4294901760
  %2208 = vmatmul.mubr.f32.gmra.mrb[0].mxu0 %v2207
  %v2209 = vpop.f32.mrb[0].mxu0
  %v2210 = vadd.f32 %v2024, %v2209
  %v2211 = vpop.f32.mrb[0].mxu0
  %2212 = vmatprep.mubr.f32.mxu0 0.0
  %v2213 = vand.u32 %v1477, 4294901760
  %v2214 = vsub.f32 %v1477, %v2213
  %v2215 = vand.u32 %v2214, 4294901760
  %2216 = vmatmul.mubr.f32.gmra.mrb[0].mxu0 %v2215
  %v2217 = vpop.f32.mrb[0].mxu0
  %v2218 = vadd.f32 %v2031, %v2217
  %v2219 = vpop.f32.mrb[0].mxu0
  %2220 = vmatprep.mubr.f32.mxu0 0.0
  %v2221 = vand.u32 %v1480, 4294901760
  %v2222 = vsub.f32 %v1480, %v2221
  %v2223 = vand.u32 %v2222, 4294901760
  %2224 = vmatmul.mubr.f32.gmra.mrb[0].mxu0 %v2223
  %v2225 = vpop.f32.mrb[0].mxu0
  %v2226 = vadd.f32 %v2038, %v2225
  %v2227 = vpop.f32.mrb[0].mxu0
  %2228 = vmatprep.mubr.f32.mxu0 0.0
  %v2229 = vand.u32 %v1483, 4294901760
  %v2230 = vsub.f32 %v1483, %v2229
  %v2231 = vand.u32 %v2230, 4294901760
  %2232 = vmatmul.mubr.f32.gmra.mrb[0].mxu0 %v2231
  %v2233 = vpop.f32.mrb[0].mxu0
  %v2234 = vadd.f32 %v2045, %v2233
  %v2235 = vpop.f32.mrb[0].mxu0
  %2236 = vmatprep.mubr.f32.mxu0 0.0
  %v2237 = vand.u32 %v1486, 4294901760
  %v2238 = vsub.f32 %v1486, %v2237
  %v2239 = vand.u32 %v2238, 4294901760
  %2240 = vmatmul.mubr.f32.gmra.mrb[0].mxu0 %v2239
  %v2241 = vpop.f32.mrb[0].mxu0
  %v2242 = vadd.f32 %v2052, %v2241
  %v2243 = vpop.f32.mrb[0].mxu0
  %2244 = vmatprep.mubr.f32.mxu0 0.0
  %v2245 = vand.u32 %v1489, 4294901760
  %v2246 = vsub.f32 %v1489, %v2245
  %v2247 = vand.u32 %v2246, 4294901760
  %2248 = vmatmul.mubr.f32.gmra.mrb[0].mxu0 %v2247
  %v2249 = vpop.f32.mrb[0].mxu0
  %v2250 = vadd.f32 %v2059, %v2249
  %v2251 = vpop.f32.mrb[0].mxu0
  %2252 = vmatprep.mubr.f32.mxu0 0.0
  %v2253 = vand.u32 %v1492, 4294901760
  %v2254 = vsub.f32 %v1492, %v2253
  %v2255 = vand.u32 %v2254, 4294901760
  %2256 = vmatmul.mubr.f32.gmra.mrb[0].mxu0 %v2255
  %v2257 = vpop.f32.mrb[0].mxu0
  %v2258 = vadd.f32 %v2066, %v2257
  %v2259 = vpop.f32.mrb[0].mxu0
  %2260 = vmatprep.mubr.f32.mxu0 0.0
  %v2261 = vand.u32 %v1495, 4294901760
  %v2262 = vsub.f32 %v1495, %v2261
  %v2263 = vand.u32 %v2262, 4294901760
  %2264 = vmatmul.mubr.f32.gmra.mrb[0].mxu0 %v2263
  %v2265 = vpop.f32.mrb[0].mxu0
  %v2266 = vadd.f32 %v2073, %v2265
  %v2267 = vpop.f32.mrb[0].mxu0
  %2268 = vmatprep.mubr.f32.mxu0 0.0
  %v2269 = vand.u32 %v1498, 4294901760
  %v2270 = vsub.f32 %v1498, %v2269
  %v2271 = vand.u32 %v2270, 4294901760
  %2272 = vmatmul.mubr.f32.gmra.mrb[0].mxu0 %v2271
  %v2273 = vpop.f32.mrb[0].mxu0
  %v2274 = vadd.f32 %v2080, %v2273
  %v2275 = vpop.f32.mrb[0].mxu0
  %2276 = vmatprep.mubr.f32.mxu0 0.0
  %v2277 = vand.u32 %v1501, 4294901760
  %v2278 = vsub.f32 %v1501, %v2277
  %v2279 = vand.u32 %v2278, 4294901760
  %2280 = vmatmul.mubr.f32.gmra.mrb[0].mxu0 %v2279
  %v2281 = vpop.f32.mrb[0].mxu0
  %v2282 = vadd.f32 %v2087, %v2281
  %v2283 = vpop.f32.mrb[0].mxu0
  %2284 = vmatprep.mubr.f32.mxu0 0.0
  %v2285 = vand.u32 %v1504, 4294901760
  %v2286 = vsub.f32 %v1504, %v2285
  %v2287 = vand.u32 %v2286, 4294901760
  %2288 = vmatmul.mubr.f32.gmra.mrb[0].mxu0 %v2287
  %v2289 = vpop.f32.mrb[0].mxu0
  %v2290 = vadd.f32 %v2094, %v2289
  %v2291 = vpop.f32.mrb[0].mxu0
  %2292 = vmatprep.mubr.f32.mxu0 0.0
  %v2293 = vand.u32 %v1507, 4294901760
  %v2294 = vsub.f32 %v1507, %v2293
  %v2295 = vand.u32 %v2294, 4294901760
  %2296 = vmatmul.mubr.f32.gmra.mrb[0].mxu0 %v2295
  %v2297 = vpop.f32.mrb[0].mxu0
  %v2298 = vadd.f32 %v2101, %v2297
  %v2299 = vpop.f32.mrb[0].mxu0
  %2300 = vdwg.mxu0
  %2301 = vmatprep.subr.mxu0 0.0
  %v2302 = vand.u32 %v1450, 4294901760
  %v2303 = vsub.f32 %v1450, %v2302
  %v2304 = vand.u32 %v2303, 4294901760
  %2305 = vmatpush1.msra.mxu0 %v2304
  %2306 = vmatprep.subr.mxu0 0.0
  %v2307 = vand.u32 %v1451, 4294901760
  %v2308 = vsub.f32 %v1451, %v2307
  %v2309 = vand.u32 %v2308, 4294901760
  %2310 = vmatpush1.msra.mxu0 %v2309
  %2311 = vmatprep.subr.mxu0 0.0
  %v2312 = vand.u32 %v1452, 4294901760
  %v2313 = vsub.f32 %v1452, %v2312
  %v2314 = vand.u32 %v2313, 4294901760
  %2315 = vmatpush1.msra.mxu0 %v2314
  %2316 = vmatprep.subr.mxu0 0.0
  %v2317 = vand.u32 %v1453, 4294901760
  %v2318 = vsub.f32 %v1453, %v2317
  %v2319 = vand.u32 %v2318, 4294901760
  %2320 = vmatpush1.msra.mxu0 %v2319
  %2321 = vmatprep.subr.mxu0 0.0
  %2322 = vmatpush1.msra.mxu0 0.0
  %2323 = vmatprep.subr.mxu0 0.0
  %2324 = vmatpush1.msra.mxu0 0.0
  %2325 = vmatprep.subr.mxu0 0.0
  %2326 = vmatpush1.msra.mxu0 0.0
  %2327 = vmatprep.subr.mxu0 0.0
  %2328 = vmatpush1.msra.mxu0 0.0
  %2329 = vmatprep.subr.mxu0 0.0
  %2330 = vmatpush1.msra.mxu0 0.0
  %2331 = vmatprep.subr.mxu0 0.0
  %2332 = vmatpush1.msra.mxu0 0.0
  %2333 = vmatprep.subr.mxu0 0.0
  %2334 = vmatpush1.msra.mxu0 0.0
  %2335 = vmatprep.subr.mxu0 0.0
  %2336 = vmatpush1.msra.mxu0 0.0
  %2337 = vmatprep.subr.mxu0 0.0
  %2338 = vmatpush1.msra.mxu0 0.0
  %2339 = vmatprep.subr.mxu0 0.0
  %2340 = vmatpush1.msra.mxu0 0.0
  %2341 = vmatprep.subr.mxu0 0.0
  %2342 = vmatpush1.msra.mxu0 0.0
  %2343 = vmatprep.subr.mxu0 0.0
  %2344 = vmatpush1.msra.mxu0 0.0
  %2345 = vmatprep.subr.mxu0 0.0
  %2346 = vmatpush1.msra.mxu0 0.0
  %2347 = vmatprep.subr.mxu0 0.0
  %2348 = vmatpush1.msra.mxu0 0.0
  %2349 = vmatprep.subr.mxu0 0.0
  %2350 = vmatpush1.msra.mxu0 0.0
  %2351 = vmatprep.subr.mxu0 0.0
  %2352 = vmatpush1.msra.mxu0 0.0
  %2353 = vmatprep.subr.mxu0 0.0
  %2354 = vmatpush1.msra.mxu0 0.0
  %2355 = vmatprep.subr.mxu0 0.0
  %2356 = vmatpush1.msra.mxu0 0.0
  %2357 = vmatprep.subr.mxu0 0.0
  %2358 = vmatpush1.msra.mxu0 0.0
  %2359 = vmatprep.subr.mxu0 0.0
  %2360 = vmatpush1.msra.mxu0 0.0
  %2361 = vmatprep.subr.mxu0 0.0
  %2362 = vmatpush1.msra.mxu0 0.0
  %2363 = vmatprep.subr.mxu0 0.0
  %2364 = vmatpush1.msra.mxu0 0.0
  %2365 = vmatprep.subr.mxu0 0.0
  %2366 = vmatpush1.msra.mxu0 0.0
  %2367 = vmatprep.subr.mxu0 0.0
  %2368 = vmatpush1.msra.mxu0 0.0
  %2369 = vmatprep.subr.mxu0 0.0
  %2370 = vmatpush1.msra.mxu0 0.0
  %2371 = vmatprep.subr.mxu0 0.0
  %2372 = vmatpush1.msra.mxu0 0.0
  %2373 = vmatprep.subr.mxu0 0.0
  %2374 = vmatpush1.msra.mxu0 0.0
  %2375 = vmatprep.subr.mxu0 0.0
  %2376 = vmatpush1.msra.mxu0 0.0
  %2377 = vmatprep.mubr.f32.mxu0 0.0
  %v2378 = vand.u32 %v1462, 4294901760
  %2379 = vmatmul.mubr.f32.gmra.mrb[0].mxu0 %v2378
  %v2380 = vpop.f32.mrb[0].mxu0
  %v2381 = vadd.f32 %v2178, %v2380
  %v2382 = vpop.f32.mrb[0].mxu0
  %2383 = vmatprep.mubr.f32.mxu0 0.0
  %v2384 = vand.u32 %v1465, 4294901760
  %2385 = vmatmul.mubr.f32.gmra.mrb[0].mxu0 %v2384
  %v2386 = vpop.f32.mrb[0].mxu0
  %v2387 = vadd.f32 %v2186, %v2386
  %v2388 = vpop.f32.mrb[0].mxu0
  %2389 = vmatprep.mubr.f32.mxu0 0.0
  %v2390 = vand.u32 %v1468, 4294901760
  %2391 = vmatmul.mubr.f32.gmra.mrb[0].mxu0 %v2390
  %v2392 = vpop.f32.mrb[0].mxu0
  %v2393 = vadd.f32 %v2194, %v2392
  %v2394 = vpop.f32.mrb[0].mxu0
  %2395 = vmatprep.mubr.f32.mxu0 0.0
  %v2396 = vand.u32 %v1471, 4294901760
  %2397 = vmatmul.mubr.f32.gmra.mrb[0].mxu0 %v2396
  %v2398 = vpop.f32.mrb[0].mxu0
  %v2399 = vadd.f32 %v2202, %v2398
  %v2400 = vpop.f32.mrb[0].mxu0
  %2401 = vmatprep.mubr.f32.mxu0 0.0
  %v2402 = vand.u32 %v1474, 4294901760
  %2403 = vmatmul.mubr.f32.gmra.mrb[0].mxu0 %v2402
  %v2404 = vpop.f32.mrb[0].mxu0
  %v2405 = vadd.f32 %v2210, %v2404
  %v2406 = vpop.f32.mrb[0].mxu0
  %2407 = vmatprep.mubr.f32.mxu0 0.0
  %v2408 = vand.u32 %v1477, 4294901760
  %2409 = vmatmul.mubr.f32.gmra.mrb[0].mxu0 %v2408
  %v2410 = vpop.f32.mrb[0].mxu0
  %v2411 = vadd.f32 %v2218, %v2410
  %v2412 = vpop.f32.mrb[0].mxu0
  %2413 = vmatprep.mubr.f32.mxu0 0.0
  %v2414 = vand.u32 %v1480, 4294901760
  %2415 = vmatmul.mubr.f32.gmra.mrb[0].mxu0 %v2414
  %v2416 = vpop.f32.mrb[0].mxu0
  %v2417 = vadd.f32 %v2226, %v2416
  %v2418 = vpop.f32.mrb[0].mxu0
  %2419 = vmatprep.mubr.f32.mxu0 0.0
  %v2420 = vand.u32 %v1483, 4294901760
  %2421 = vmatmul.mubr.f32.gmra.mrb[0].mxu0 %v2420
  %v2422 = vpop.f32.mrb[0].mxu0
  %v2423 = vadd.f32 %v2234, %v2422
  %v2424 = vpop.f32.mrb[0].mxu0
  %2425 = vmatprep.mubr.f32.mxu0 0.0
  %v2426 = vand.u32 %v1486, 4294901760
  %2427 = vmatmul.mubr.f32.gmra.mrb[0].mxu0 %v2426
  %v2428 = vpop.f32.mrb[0].mxu0
  %v2429 = vadd.f32 %v2242, %v2428
  %v2430 = vpop.f32.mrb[0].mxu0
  %2431 = vmatprep.mubr.f32.mxu0 0.0
  %v2432 = vand.u32 %v1489, 4294901760
  %2433 = vmatmul.mubr.f32.gmra.mrb[0].mxu0 %v2432
  %v2434 = vpop.f32.mrb[0].mxu0
  %v2435 = vadd.f32 %v2250, %v2434
  %v2436 = vpop.f32.mrb[0].mxu0
  %2437 = vmatprep.mubr.f32.mxu0 0.0
  %v2438 = vand.u32 %v1492, 4294901760
  %2439 = vmatmul.mubr.f32.gmra.mrb[0].mxu0 %v2438
  %v2440 = vpop.f32.mrb[0].mxu0
  %v2441 = vadd.f32 %v2258, %v2440
  %v2442 = vpop.f32.mrb[0].mxu0
  %2443 = vmatprep.mubr.f32.mxu0 0.0
  %v2444 = vand.u32 %v1495, 4294901760
  %2445 = vmatmul.mubr.f32.gmra.mrb[0].mxu0 %v2444
  %v2446 = vpop.f32.mrb[0].mxu0
  %v2447 = vadd.f32 %v2266, %v2446
  %v2448 = vpop.f32.mrb[0].mxu0
  %2449 = vmatprep.mubr.f32.mxu0 0.0
  %v2450 = vand.u32 %v1498, 4294901760
  %2451 = vmatmul.mubr.f32.gmra.mrb[0].mxu0 %v2450
  %v2452 = vpop.f32.mrb[0].mxu0
  %v2453 = vadd.f32 %v2274, %v2452
  %v2454 = vpop.f32.mrb[0].mxu0
  %2455 = vmatprep.mubr.f32.mxu0 0.0
  %v2456 = vand.u32 %v1501, 4294901760
  %2457 = vmatmul.mubr.f32.gmra.mrb[0].mxu0 %v2456
  %v2458 = vpop.f32.mrb[0].mxu0
  %v2459 = vadd.f32 %v2282, %v2458
  %v2460 = vpop.f32.mrb[0].mxu0
  %2461 = vmatprep.mubr.f32.mxu0 0.0
  %v2462 = vand.u32 %v1504, 4294901760
  %2463 = vmatmul.mubr.f32.gmra.mrb[0].mxu0 %v2462
  %v2464 = vpop.f32.mrb[0].mxu0
  %v2465 = vadd.f32 %v2290, %v2464
  %v2466 = vpop.f32.mrb[0].mxu0
  %2467 = vmatprep.mubr.f32.mxu0 0.0
  %v2468 = vand.u32 %v1507, 4294901760
  %2469 = vmatmul.mubr.f32.gmra.mrb[0].mxu0 %v2468
  %v2470 = vpop.f32.mrb[0].mxu0
  %v2471 = vadd.f32 %v2298, %v2470
  %v2472 = vpop.f32.mrb[0].mxu0
  %2473 = vdwg.mxu0
  %2474 = vmatprep.subr.mxu0 0.0
  %v2475 = vand.u32 %v1450, 4294901760
  %2476 = vmatpush1.msra.mxu0 %v2475
  %2477 = vmatprep.subr.mxu0 0.0
  %v2478 = vand.u32 %v1451, 4294901760
  %2479 = vmatpush1.msra.mxu0 %v2478
  %2480 = vmatprep.subr.mxu0 0.0
  %v2481 = vand.u32 %v1452, 4294901760
  %2482 = vmatpush1.msra.mxu0 %v2481
  %2483 = vmatprep.subr.mxu0 0.0
  %v2484 = vand.u32 %v1453, 4294901760
  %2485 = vmatpush1.msra.mxu0 %v2484
  %2486 = vmatprep.subr.mxu0 0.0
  %2487 = vmatpush1.msra.mxu0 0.0
  %2488 = vmatprep.subr.mxu0 0.0
  %2489 = vmatpush1.msra.mxu0 0.0
  %2490 = vmatprep.subr.mxu0 0.0
  %2491 = vmatpush1.msra.mxu0 0.0
  %2492 = vmatprep.subr.mxu0 0.0
  %2493 = vmatpush1.msra.mxu0 0.0
  %2494 = vmatprep.subr.mxu0 0.0
  %2495 = vmatpush1.msra.mxu0 0.0
  %2496 = vmatprep.subr.mxu0 0.0
  %2497 = vmatpush1.msra.mxu0 0.0
  %2498 = vmatprep.subr.mxu0 0.0
  %2499 = vmatpush1.msra.mxu0 0.0
  %2500 = vmatprep.subr.mxu0 0.0
  %2501 = vmatpush1.msra.mxu0 0.0
  %2502 = vmatprep.subr.mxu0 0.0
  %2503 = vmatpush1.msra.mxu0 0.0
  %2504 = vmatprep.subr.mxu0 0.0
  %2505 = vmatpush1.msra.mxu0 0.0
  %2506 = vmatprep.subr.mxu0 0.0
  %2507 = vmatpush1.msra.mxu0 0.0
  %2508 = vmatprep.subr.mxu0 0.0
  %2509 = vmatpush1.msra.mxu0 0.0
  %2510 = vmatprep.subr.mxu0 0.0
  %2511 = vmatpush1.msra.mxu0 0.0
  %2512 = vmatprep.subr.mxu0 0.0
  %2513 = vmatpush1.msra.mxu0 0.0
  %2514 = vmatprep.subr.mxu0 0.0
  %2515 = vmatpush1.msra.mxu0 0.0
  %2516 = vmatprep.subr.mxu0 0.0
  %2517 = vmatpush1.msra.mxu0 0.0
  %2518 = vmatprep.subr.mxu0 0.0
  %2519 = vmatpush1.msra.mxu0 0.0
  %2520 = vmatprep.subr.mxu0 0.0
  %2521 = vmatpush1.msra.mxu0 0.0
  %2522 = vmatprep.subr.mxu0 0.0
  %2523 = vmatpush1.msra.mxu0 0.0
  %2524 = vmatprep.subr.mxu0 0.0
  %2525 = vmatpush1.msra.mxu0 0.0
  %2526 = vmatprep.subr.mxu0 0.0
  %2527 = vmatpush1.msra.mxu0 0.0
  %2528 = vmatprep.subr.mxu0 0.0
  %2529 = vmatpush1.msra.mxu0 0.0
  %2530 = vmatprep.subr.mxu0 0.0
  %2531 = vmatpush1.msra.mxu0 0.0
  %2532 = vmatprep.subr.mxu0 0.0
  %2533 = vmatpush1.msra.mxu0 0.0
  %2534 = vmatprep.subr.mxu0 0.0
  %2535 = vmatpush1.msra.mxu0 0.0
  %2536 = vmatprep.subr.mxu0 0.0
  %2537 = vmatpush1.msra.mxu0 0.0
  %2538 = vmatprep.subr.mxu0 0.0
  %2539 = vmatpush1.msra.mxu0 0.0
  %2540 = vmatprep.subr.mxu0 0.0
  %2541 = vmatpush1.msra.mxu0 0.0
  %2542 = vmatprep.mubr.f32.mxu0 0.0
  %v2543 = vand.u32 %v1462, 4294901760
  %2544 = vmatmul.mubr.f32.gmra.mrb[0].mxu0 %v2543
  %v2545 = vpop.f32.mrb[0].mxu0
  %v2546 = vadd.f32 %v2381, %v2545
  %v2547 = vpop.f32.mrb[0].mxu0
  %2548 = vmatprep.mubr.f32.mxu0 0.0
  %v2549 = vand.u32 %v1465, 4294901760
  %2550 = vmatmul.mubr.f32.gmra.mrb[0].mxu0 %v2549
  %v2551 = vpop.f32.mrb[0].mxu0
  %v2552 = vadd.f32 %v2387, %v2551
  %v2553 = vpop.f32.mrb[0].mxu0
  %2554 = vmatprep.mubr.f32.mxu0 0.0
  %v2555 = vand.u32 %v1468, 4294901760
  %2556 = vmatmul.mubr.f32.gmra.mrb[0].mxu0 %v2555
  %v2557 = vpop.f32.mrb[0].mxu0
  %v2558 = vadd.f32 %v2393, %v2557
  %v2559 = vpop.f32.mrb[0].mxu0
  %2560 = vmatprep.mubr.f32.mxu0 0.0
  %v2561 = vand.u32 %v1471, 4294901760
  %2562 = vmatmul.mubr.f32.gmra.mrb[0].mxu0 %v2561
  %v2563 = vpop.f32.mrb[0].mxu0
  %v2564 = vadd.f32 %v2399, %v2563
  %v2565 = vpop.f32.mrb[0].mxu0
  %2566 = vmatprep.mubr.f32.mxu0 0.0
  %v2567 = vand.u32 %v1474, 4294901760
  %2568 = vmatmul.mubr.f32.gmra.mrb[0].mxu0 %v2567
  %v2569 = vpop.f32.mrb[0].mxu0
  %v2570 = vadd.f32 %v2405, %v2569
  %v2571 = vpop.f32.mrb[0].mxu0
  %2572 = vmatprep.mubr.f32.mxu0 0.0
  %v2573 = vand.u32 %v1477, 4294901760
  %2574 = vmatmul.mubr.f32.gmra.mrb[0].mxu0 %v2573
  %v2575 = vpop.f32.mrb[0].mxu0
  %v2576 = vadd.f32 %v2411, %v2575
  %v2577 = vpop.f32.mrb[0].mxu0
  %2578 = vmatprep.mubr.f32.mxu0 0.0
  %v2579 = vand.u32 %v1480, 4294901760
  %2580 = vmatmul.mubr.f32.gmra.mrb[0].mxu0 %v2579
  %v2581 = vpop.f32.mrb[0].mxu0
  %v2582 = vadd.f32 %v2417, %v2581
  %v2583 = vpop.f32.mrb[0].mxu0
  %2584 = vmatprep.mubr.f32.mxu0 0.0
  %v2585 = vand.u32 %v1483, 4294901760
  %2586 = vmatmul.mubr.f32.gmra.mrb[0].mxu0 %v2585
  %v2587 = vpop.f32.mrb[0].mxu0
  %v2588 = vadd.f32 %v2423, %v2587
  %v2589 = vpop.f32.mrb[0].mxu0
  %2590 = vmatprep.mubr.f32.mxu0 0.0
  %v2591 = vand.u32 %v1486, 4294901760
  %2592 = vmatmul.mubr.f32.gmra.mrb[0].mxu0 %v2591
  %v2593 = vpop.f32.mrb[0].mxu0
  %v2594 = vadd.f32 %v2429, %v2593
  %v2595 = vpop.f32.mrb[0].mxu0
  %2596 = vmatprep.mubr.f32.mxu0 0.0
  %v2597 = vand.u32 %v1489, 4294901760
  %2598 = vmatmul.mubr.f32.gmra.mrb[0].mxu0 %v2597
  %v2599 = vpop.f32.mrb[0].mxu0
  %v2600 = vadd.f32 %v2435, %v2599
  %v2601 = vpop.f32.mrb[0].mxu0
  %2602 = vmatprep.mubr.f32.mxu0 0.0
  %v2603 = vand.u32 %v1492, 4294901760
  %2604 = vmatmul.mubr.f32.gmra.mrb[0].mxu0 %v2603
  %v2605 = vpop.f32.mrb[0].mxu0
  %v2606 = vadd.f32 %v2441, %v2605
  %v2607 = vpop.f32.mrb[0].mxu0
  %2608 = vmatprep.mubr.f32.mxu0 0.0
  %v2609 = vand.u32 %v1495, 4294901760
  %2610 = vmatmul.mubr.f32.gmra.mrb[0].mxu0 %v2609
  %v2611 = vpop.f32.mrb[0].mxu0
  %v2612 = vadd.f32 %v2447, %v2611
  %v2613 = vpop.f32.mrb[0].mxu0
  %2614 = vmatprep.mubr.f32.mxu0 0.0
  %v2615 = vand.u32 %v1498, 4294901760
  %2616 = vmatmul.mubr.f32.gmra.mrb[0].mxu0 %v2615
  %v2617 = vpop.f32.mrb[0].mxu0
  %v2618 = vadd.f32 %v2453, %v2617
  %v2619 = vpop.f32.mrb[0].mxu0
  %2620 = vmatprep.mubr.f32.mxu0 0.0
  %v2621 = vand.u32 %v1501, 4294901760
  %2622 = vmatmul.mubr.f32.gmra.mrb[0].mxu0 %v2621
  %v2623 = vpop.f32.mrb[0].mxu0
  %v2624 = vadd.f32 %v2459, %v2623
  %v2625 = vpop.f32.mrb[0].mxu0
  %2626 = vmatprep.mubr.f32.mxu0 0.0
  %v2627 = vand.u32 %v1504, 4294901760
  %2628 = vmatmul.mubr.f32.gmra.mrb[0].mxu0 %v2627
  %v2629 = vpop.f32.mrb[0].mxu0
  %v2630 = vadd.f32 %v2465, %v2629
  %v2631 = vpop.f32.mrb[0].mxu0
  %2632 = vmatprep.mubr.f32.mxu0 0.0
  %v2633 = vand.u32 %v1507, 4294901760
  %2634 = vmatmul.mubr.f32.gmra.mrb[0].mxu0 %v2633
  %v2635 = vpop.f32.mrb[0].mxu0
  %v2636 = vadd.f32 %v2471, %v2635
  %v2637 = vpop.f32.mrb[0].mxu0
  %2638 = vdwg.mxu0
  %v2639 = vxor.u32 %v2546, 2147483648
  %v2640 = vxor.u32 %v2552, 2147483648
  %v2641 = vxor.u32 %v2558, 2147483648
  %v2642 = vxor.u32 %v2564, 2147483648
  %v2643 = vxor.u32 %v2570, 2147483648
  %v2644 = vxor.u32 %v2576, 2147483648
  %v2645 = vxor.u32 %v2582, 2147483648
  %v2646 = vxor.u32 %v2588, 2147483648
  %v2647 = vxor.u32 %v2594, 2147483648
  %v2648 = vxor.u32 %v2600, 2147483648
  %v2649 = vxor.u32 %v2606, 2147483648
  %v2650 = vxor.u32 %v2612, 2147483648
  %v2651 = vxor.u32 %v2618, 2147483648
  %v2652 = vxor.u32 %v2624, 2147483648
  %v2653 = vxor.u32 %v2630, 2147483648
  %v2654 = vxor.u32 %v2636, 2147483648
  %v2655 = vmul.f32 %v2639, 1.442695
  %v2656 = vpow.pop %v2655
  %v2657 = vmul.f32 %v2640, 1.442695
  %v2658 = vpow.pop %v2657
  %v2659 = vmul.f32 %v2641, 1.442695
  %v2660 = vpow.pop %v2659
  %v2661 = vmul.f32 %v2642, 1.442695
  %v2662 = vpow.pop %v2661
  %v2663 = vmul.f32 %v2643, 1.442695
  %v2664 = vpow.pop %v2663
  %v2665 = vmul.f32 %v2644, 1.442695
  %v2666 = vpow.pop %v2665
  %v2667 = vmul.f32 %v2645, 1.442695
  %v2668 = vpow.pop %v2667
  %v2669 = vmul.f32 %v2646, 1.442695
  %v2670 = vpow.pop %v2669
  %v2671 = vmul.f32 %v2647, 1.442695
  %v2672 = vpow.pop %v2671
  %v2673 = vmul.f32 %v2648, 1.442695
  %v2674 = vpow.pop %v2673
  %v2675 = vmul.f32 %v2649, 1.442695
  %v2676 = vpow.pop %v2675
  %v2677 = vmul.f32 %v2650, 1.442695
  %v2678 = vpow.pop %v2677
  %v2679 = vmul.f32 %v2651, 1.442695
  %v2680 = vpow.pop %v2679
  %v2681 = vmul.f32 %v2652, 1.442695
  %v2682 = vpow.pop %v2681
  %v2683 = vmul.f32 %v2653, 1.442695
  %v2684 = vpow.pop %v2683
  %v2685 = vmul.f32 %v2654, 1.442695
  %v2686 = vpow.pop %v2685
  %v2687 = vadd.f32 %v2656, 1.0
  %v2688 = vadd.f32 %v2658, 1.0
  %v2689 = vadd.f32 %v2660, 1.0
  %v2690 = vadd.f32 %v2662, 1.0
  %v2691 = vadd.f32 %v2664, 1.0
  %v2692 = vadd.f32 %v2666, 1.0
  %v2693 = vadd.f32 %v2668, 1.0
  %v2694 = vadd.f32 %v2670, 1.0
  %v2695 = vadd.f32 %v2672, 1.0
  %v2696 = vadd.f32 %v2674, 1.0
  %v2697 = vadd.f32 %v2676, 1.0
  %v2698 = vadd.f32 %v2678, 1.0
  %v2699 = vadd.f32 %v2680, 1.0
  %v2700 = vadd.f32 %v2682, 1.0
  %v2701 = vadd.f32 %v2684, 1.0
  %v2702 = vadd.f32 %v2686, 1.0
  %v2703 = vrcp.pop %v2687
  %v2704 = vmul.f32 1.0, %v2703
  %v2705 = vrcp.pop %v2688
  %v2706 = vmul.f32 1.0, %v2705
  %v2707 = vrcp.pop %v2689
  %v2708 = vmul.f32 1.0, %v2707
  %v2709 = vrcp.pop %v2690
  %v2710 = vmul.f32 1.0, %v2709
  %v2711 = vrcp.pop %v2691
  %v2712 = vmul.f32 1.0, %v2711
  %v2713 = vrcp.pop %v2692
  %v2714 = vmul.f32 1.0, %v2713
  %v2715 = vrcp.pop %v2693
  %v2716 = vmul.f32 1.0, %v2715
  %v2717 = vrcp.pop %v2694
  %v2718 = vmul.f32 1.0, %v2717
  %v2719 = vrcp.pop %v2695
  %v2720 = vmul.f32 1.0, %v2719
  %v2721 = vrcp.pop %v2696
  %v2722 = vmul.f32 1.0, %v2721
  %v2723 = vrcp.pop %v2697
  %v2724 = vmul.f32 1.0, %v2723
  %v2725 = vrcp.pop %v2698
  %v2726 = vmul.f32 1.0, %v2725
  %v2727 = vrcp.pop %v2699
  %v2728 = vmul.f32 1.0, %v2727
  %v2729 = vrcp.pop %v2700
  %v2730 = vmul.f32 1.0, %v2729
  %v2731 = vrcp.pop %v2701
  %v2732 = vmul.f32 1.0, %v2731
  %v2733 = vrcp.pop %v2702
  %v2734 = vmul.f32 1.0, %v2733
  %2735 = vst.msk [vmem:[%s5] sm:$0xff] %vm159, %v2704
  %2736 = vst.msk [vmem:[%s5 + $0x8] sm:$0xff] %vm159, %v2706
  %2737 = vst.msk [vmem:[%s5 + $0x10] sm:$0xff] %vm159, %v2708
  %2738 = vst.msk [vmem:[%s5 + $0x18] sm:$0xff] %vm159, %v2710
  %2739 = vst.msk [vmem:[%s5 + $0x20] sm:$0xff] %vm159, %v2712
  %2740 = vst.msk [vmem:[%s5 + $0x28] sm:$0xff] %vm159, %v2714
  %2741 = vst.msk [vmem:[%s5 + $0x30] sm:$0xff] %vm159, %v2716
  %2742 = vst.msk [vmem:[%s5 + $0x38] sm:$0xff] %vm159, %v2718
  %2743 = vst.msk [vmem:[%s5 + $0x40] sm:$0xff] %vm159, %v2720
  %2744 = vst.msk [vmem:[%s5 + $0x48] sm:$0xff] %vm159, %v2722
  %2745 = vst.msk [vmem:[%s5 + $0x50] sm:$0xff] %vm159, %v2724
  %2746 = vst.msk [vmem:[%s5 + $0x58] sm:$0xff] %vm159, %v2726
  %2747 = vst.msk [vmem:[%s5 + $0x60] sm:$0xff] %vm159, %v2728
  %2748 = vst.msk [vmem:[%s5 + $0x68] sm:$0xff] %vm159, %v2730
  %2749 = vst.msk [vmem:[%s5 + $0x70] sm:$0xff] %vm159, %v2732
  %2750 = vst.msk [vmem:[%s5 + $0x78] sm:$0xff] %vm159, %v2734
  // Predicated region
  $region22: #{tpu_custom_call.1} parent=0 // pred_check
    _
  $region23: #{tpu_custom_call.1} parent=0 // pred_check_branch
    %2752 = sbr.rel (0) target = $region25
  $region24: #{tpu_custom_call.1} parent=0 // pred_region
    _
  $region25: #{tpu_custom_call.1} parent=0 // pred_fallthru
    _
  // Predicated region
  $region26: #{tpu_custom_call.1} parent=0 // pred_check
    _
  $region27: #{tpu_custom_call.1} parent=0 // pred_check_branch
    %2754 = sbr.rel (0) target = $region29
  $region28: #{tpu_custom_call.1} parent=0 // pred_region
    _
  $region29: #{tpu_custom_call.1} parent=0 // pred_fallthru
    _

</llo_original>
